<compile_context>
chip_gen: v6e
topology: v6e:2x2x1
jax: 0.10.0
libtpu: 0.0.40
codegen_flags: <defaults>
</compile_context>

<pallas_src>
import jax
import jax.numpy as jnp
from jax import lax
from jax.experimental import pallas as pl
from jax.experimental.pallas import tpu as pltpu

# ---- small synthetic sizes consistent with the module ----------------------
B = 2                      # batch
S = 8                      # MODEL_MAX_SEQ_LEN (small synthetic value)
EMB = 128                  # TransformerWrapper emb_dim
D = 768                    # model dim (Linear(768, ...) in the module)
VOCAB_SIZE = 248
V = VOCAB_SIZE + 8         # vocab_output_layer out_features = 256
NUM_CLASSES = 2            # classifier = nn.Linear(768, 2)
N_RETRIEVED = 5            # search_similars(query, 5)
M = B * S                  # total token rows


# ----------------------------------------------------------- fused kernel ---
def _fid_fused_kernel(ids_ref, emb_ref, wp_ref, bp_ref, wv_ref, bv_ref,
                      wc_ref, bc_ref, out_ids_ref, probs_ref, d_ref):
    # ---- embedding lookup as one-hot matmul (gather stays in VMEM) ---------
    ids = ids_ref[...]                                            # [M, 1] i32
    viota = lax.broadcasted_iota(jnp.int32, (M, V), 1)            # [M, V]
    onehot = (viota == ids).astype(jnp.bfloat16)                  # [M, V]
    x_emb = jnp.dot(onehot, emb_ref[...],
                    preferred_element_type=jnp.float32)           # [M, EMB] f32

    # ---- encoder stand-in: emb -> dim projection (bf16 MXU, f32 acc) -------
    # TODO(synk): the colt5 TransformerWrapper encoder (5 attn layers +
    # HiddenLayerExtractor hook) has no compact Pallas equivalent; stand-in is
    # the embedding lookup above + this projection to the [M, 768] hidden state.
    h = (jnp.dot(x_emb.astype(jnp.bfloat16), wp_ref[...],
                 preferred_element_type=jnp.float32)
         + bp_ref[...])                                           # [M, D] f32

    # ---- vocab_output_layer + argmax over vocab (torch dim=2), fused -------
    logits_v = (jnp.dot(h.astype(jnp.bfloat16), wv_ref[...],
                        preferred_element_type=jnp.float32)
                + bv_ref[...])                                    # [M, V] f32
    vmax = jnp.max(logits_v, axis=-1, keepdims=True)
    # first index attaining the max (torch.argmax does not guarantee tie order;
    # first-index is a deterministic compatible choice)
    cand_v = jnp.where(logits_v == vmax, viota, jnp.int32(V))
    out_ids_ref[...] = jnp.min(cand_v, axis=-1, keepdims=True)    # [M, 1] i32

    # ---- x.mean(dim=1) -> classifier -> softmax(dim=1) -> argmax(dim=1) ----
    # pooled for the whole batch at once (tile-aligned static slices, one
    # sublane reduce per batch row, single classifier evaluation afterwards).
    pooled = jnp.concatenate(
        [jnp.mean(h[b * S:(b + 1) * S, :], axis=0, keepdims=True)
         for b in range(B)], axis=0)                              # [B, D] f32
    wc = wc_ref[...]                                              # [C, D] f32
    # C=2: a [*,768]x[768,2] MXU matmul would waste the array; do a VPU
    # broadcast-multiply + lane-sum per class instead.
    cols = [jnp.sum(pooled * wc[c:c + 1, :], axis=-1, keepdims=True)
            for c in range(NUM_CLASSES)]                          # C x [B, 1]
    logits_c = jnp.concatenate(cols, axis=-1) + bc_ref[...]       # [B, C] f32
    cmax = jnp.max(logits_c, axis=-1, keepdims=True)
    e = jnp.exp(logits_c - cmax)
    probs_ref[...] = e / jnp.sum(e, axis=-1, keepdims=True)       # softmax
    # argmax on logits (monotonic w.r.t. softmax, cheaper and more robust)
    ciota = lax.broadcasted_iota(jnp.int32, (B, NUM_CLASSES), 1)
    cand_c = jnp.where(logits_c == cmax, ciota, jnp.int32(NUM_CLASSES))
    d_ref[...] = jnp.min(cand_c, axis=-1, keepdims=True)          # [B, 1] i32


# ---------------------------------------------------------------- wrapper ---
def fusion_in_decoder_pallas(x_ids, emb_table, w_proj, b_proj,
                             w_vocab, b_vocab, w_cls, b_cls):
    ids2d = x_ids.reshape(M, 1).astype(jnp.int32)

    def whole(shape):
        return pl.BlockSpec(shape, lambda i, _s=shape: (0,) * len(_s))

    out_ids, probs, d = pl.pallas_call(
        _fid_fused_kernel,
        out_shape=(jax.ShapeDtypeStruct((M, 1), jnp.int32),
                   jax.ShapeDtypeStruct((B, NUM_CLASSES), jnp.float32),
                   jax.ShapeDtypeStruct((B, 1), jnp.int32)),
        grid=(1,),
        in_specs=[whole((M, 1)),                 # token ids
                  whole((V, EMB)),               # embedding table (bf16)
                  whole((EMB, D)), whole((1, D)),        # emb->dim proj
                  whole((D, V)), whole((1, V)),          # vocab_output_layer
                  whole((NUM_CLASSES, D)), whole((1, NUM_CLASSES))],  # classifier
        out_specs=(whole((M, 1)),
                   whole((B, NUM_CLASSES)),
                   whole((B, 1))),
        compiler_params=pltpu.CompilerParams(
            dimension_semantics=("arbitrary",)),
    )(ids2d, emb_table, w_proj, b_proj, w_vocab, b_vocab, w_cls, b_cls)

    return out_ids[:, 0].reshape(B, S), probs, d[:, 0]


# ------------------------------------------------------------------- main ---
if __name__ == "__main__":
    key = jax.random.PRNGKey(0)
    (k_ids, k_emb, k_wp, k_bp, k_wv, k_bv, k_wc, k_bc,
     k_docs) = jax.random.split(key, 9)

    # deterministic synthetic parameters (shapes from the module's __init__);
    # big matmul weights stored in bf16 (half the DMA, native MXU operand dtype)
    emb_table = (0.02 * jax.random.normal(k_emb, (V, EMB), jnp.float32)
                 ).astype(jnp.bfloat16)
    w_proj = (0.02 * jax.random.normal(k_wp, (EMB, D), jnp.float32)
              ).astype(jnp.bfloat16)
    b_proj = 0.02 * jax.random.normal(k_bp, (1, D), jnp.float32)
    w_vocab = (0.02 * jax.random.normal(k_wv, (D, V), jnp.float32)
               ).astype(jnp.bfloat16)                     # Linear(768, V)
    b_vocab = 0.02 * jax.random.normal(k_bv, (1, V), jnp.float32)
    w_cls = 0.02 * jax.random.normal(k_wc, (NUM_CLASSES, D), jnp.float32)  # [2,768]
    b_cls = 0.02 * jax.random.normal(k_bc, (1, NUM_CLASSES), jnp.float32)

    # input token ids
    x_ids = jax.random.randint(k_ids, (B, S), 0, V, dtype=jnp.int32)

    # one fused Pallas launch: embed -> project -> vocab argmax -> pool/classify
    output_ids, probs, d = fusion_in_decoder_pallas(
        x_ids, emb_table, w_proj, b_proj, w_vocab, b_vocab, w_cls, b_cls)

    # TODO(synk): vocab.decode / fastbm25 search_similars / trunc_pad are
    # host-side string & retrieval ops with no Pallas equivalent; synthesize
    # deterministic "retrieved" docs of shape [N_RETRIEVED, MODEL_MAX_SEQ_LEN].
    similar_docs = jax.random.randint(k_docs, (N_RETRIEVED, S), 0, V,
                                      dtype=jnp.int32)
    cat_ids = jnp.concatenate([output_ids, similar_docs], axis=0)   # cat(dim=0)
    decoder_input_ids = cat_ids.reshape(1, -1)                      # flatten().unsqueeze(0)

    # TODO(synk): self.decoder (colt5 TransformerWrapper with domain embedding)
    # is not implemented; the reference forward also raises ZeroDivisionError
    # (`a = 2 / 0`) before returning, so there is no final tensor to reproduce.
    jax.block_until_ready((output_ids, decoder_input_ids, probs, d))
    print("KERNEL_OK")
</pallas_src>

<mosaic_0001>
module attributes {stable_mosaic.version = 11 : i64} {
  func.func @_fid_fused_kernel(%arg0: i32, %arg1: memref<16x1xi32, #tpu.memory_space<vmem>>, %arg2: memref<256x128xbf16, #tpu.memory_space<vmem>>, %arg3: memref<128x768xbf16, #tpu.memory_space<vmem>>, %arg4: memref<1x768xf32, #tpu.memory_space<vmem>>, %arg5: memref<768x256xbf16, #tpu.memory_space<vmem>>, %arg6: memref<1x256xf32, #tpu.memory_space<vmem>>, %arg7: memref<2x768xf32, #tpu.memory_space<vmem>>, %arg8: memref<1x2xf32, #tpu.memory_space<vmem>>, %arg9: memref<16x1xi32, #tpu.memory_space<vmem>>, %arg10: memref<2x2xf32, #tpu.memory_space<vmem>>, %arg11: memref<2x1xi32, #tpu.memory_space<vmem>>) attributes {dimension_semantics = [#tpu.dimension_semantics<arbitrary>], iteration_bounds = array<i64: 1>, scalar_prefetch = 0 : i64, scratch_operands = 0 : i64, tpu.core_type = #tpu.core_type<tc>, window_params = [{pipeline_mode = #tpu.pipeline_mode<synchronous>, transform_indices = @transform_0, window_bounds = array<i64: 16, 1>}, {pipeline_mode = #tpu.pipeline_mode<synchronous>, transform_indices = @transform_1, window_bounds = array<i64: 256, 128>}, {pipeline_mode = #tpu.pipeline_mode<synchronous>, transform_indices = @transform_2, window_bounds = array<i64: 128, 768>}, {pipeline_mode = #tpu.pipeline_mode<synchronous>, transform_indices = @transform_3, window_bounds = array<i64: 1, 768>}, {pipeline_mode = #tpu.pipeline_mode<synchronous>, transform_indices = @transform_4, window_bounds = array<i64: 768, 256>}, {pipeline_mode = #tpu.pipeline_mode<synchronous>, transform_indices = @transform_5, window_bounds = array<i64: 1, 256>}, {pipeline_mode = #tpu.pipeline_mode<synchronous>, transform_indices = @transform_6, window_bounds = array<i64: 2, 768>}, {pipeline_mode = #tpu.pipeline_mode<synchronous>, transform_indices = @transform_7, window_bounds = array<i64: 1, 2>}, {pipeline_mode = #tpu.pipeline_mode<synchronous>, transform_indices = @transform_8, window_bounds = array<i64: 16, 1>}, {pipeline_mode = #tpu.pipeline_mode<synchronous>, transform_indices = @transform_9, window_bounds = array<i64: 2, 2>}, {pipeline_mode = #tpu.pipeline_mode<synchronous>, transform_indices = @transform_10, window_bounds = array<i64: 2, 1>}]} {
    %c0 = arith.constant 0 : index
    %c0_0 = arith.constant 0 : index
    %0 = vector.load %arg1[%c0, %c0_0] : memref<16x1xi32, #tpu.memory_space<vmem>>, vector<16x1xi32>
    %1 = tpu.iota {dimensions = array<i32: 1>} : vector<16x256xi32>
    %2 = vector.broadcast %0 : vector<16x1xi32> to vector<16x256xi32>
    %3 = arith.cmpi eq, %1, %2 : vector<16x256xi32>
    %4 = arith.extui %3 : vector<16x256xi1> to vector<16x256xi32>
    %5 = arith.sitofp %4 : vector<16x256xi32> to vector<16x256xf32>
    %6 = arith.truncf %5 : vector<16x256xf32> to vector<16x256xbf16>
    %c0_1 = arith.constant 0 : index
    %c0_2 = arith.constant 0 : index
    %7 = vector.load %arg2[%c0_1, %c0_2] : memref<256x128xbf16, #tpu.memory_space<vmem>>, vector<256x128xbf16>
    %cst = arith.constant dense<0.000000e+00> : vector<16x128xf32>
    %8 = tpu.matmul %6, %7, %cst {dimension_numbers = #tpu.dot_dimension_numbers<[1], [0], [0], [1], [0, 0, 1, 1], [], []>} : vector<16x256xbf16>, vector<256x128xbf16>, vector<16x128xf32> -> vector<16x128xf32>
    %9 = arith.truncf %8 : vector<16x128xf32> to vector<16x128xbf16>
    %c0_3 = arith.constant 0 : index
    %c0_4 = arith.constant 0 : index
    %10 = vector.load %arg3[%c0_3, %c0_4] : memref<128x768xbf16, #tpu.memory_space<vmem>>, vector<128x768xbf16>
    %cst_5 = arith.constant dense<0.000000e+00> : vector<16x768xf32>
    %11 = tpu.matmul %9, %10, %cst_5 {dimension_numbers = #tpu.dot_dimension_numbers<[1], [0], [0], [1], [0, 0, 1, 1], [], []>} : vector<16x128xbf16>, vector<128x768xbf16>, vector<16x768xf32> -> vector<16x768xf32>
    %c0_6 = arith.constant 0 : index
    %c0_7 = arith.constant 0 : index
    %12 = vector.load %arg4[%c0_6, %c0_7] : memref<1x768xf32, #tpu.memory_space<vmem>>, vector<1x768xf32>
    %13 = vector.broadcast %12 : vector<1x768xf32> to vector<16x768xf32>
    %14 = arith.addf %11, %13 : vector<16x768xf32>
    %15 = arith.truncf %14 : vector<16x768xf32> to vector<16x768xbf16>
    %c0_8 = arith.constant 0 : index
    %c0_9 = arith.constant 0 : index
    %16 = vector.load %arg5[%c0_8, %c0_9] : memref<768x256xbf16, #tpu.memory_space<vmem>>, vector<768x256xbf16>
    %cst_10 = arith.constant dense<0.000000e+00> : vector<16x256xf32>
    %17 = tpu.matmul %15, %16, %cst_10 {dimension_numbers = #tpu.dot_dimension_numbers<[1], [0], [0], [1], [0, 0, 1, 1], [], []>} : vector<16x768xbf16>, vector<768x256xbf16>, vector<16x256xf32> -> vector<16x256xf32>
    %c0_11 = arith.constant 0 : index
    %c0_12 = arith.constant 0 : index
    %18 = vector.load %arg6[%c0_11, %c0_12] : memref<1x256xf32, #tpu.memory_space<vmem>>, vector<1x256xf32>
    %19 = vector.broadcast %18 : vector<1x256xf32> to vector<16x256xf32>
    %20 = arith.addf %17, %19 : vector<16x256xf32>
    %cst_13 = arith.constant dense<0xFF800000> : vector<16xf32>
    %21 = vector.multi_reduction <maximumf>, %20, %cst_13 [1] : vector<16x256xf32> to vector<16xf32>
    %22 = vector.shape_cast %21 : vector<16xf32> to vector<16x1xf32>
    %23 = vector.broadcast %22 : vector<16x1xf32> to vector<16x256xf32>
    %24 = arith.cmpf oeq, %20, %23 : vector<16x256xf32>
    %c256_i32 = arith.constant 256 : i32
    %25 = vector.broadcast %c256_i32 : i32 to vector<16x256xi32>
    %26 = arith.select %24, %1, %25 : vector<16x256xi1>, vector<16x256xi32>
    %cst_14 = arith.constant dense<2147483647> : vector<16xi32>
    %27 = vector.multi_reduction <minsi>, %26, %cst_14 [1] : vector<16x256xi32> to vector<16xi32>
    %28 = vector.shape_cast %27 : vector<16xi32> to vector<16x1xi32>
    %c0_15 = arith.constant 0 : index
    %c0_16 = arith.constant 0 : index
    %29 = vector.load %arg9[%c0_15, %c0_16] : memref<16x1xi32, #tpu.memory_space<vmem>>, vector<16x1xi32>
    tpu.vector_store %arg9[%c0_15, %c0_16], %28 {strides = array<i32>} : memref<16x1xi32, #tpu.memory_space<vmem>>, vector<16x1xi32>,
    %30 = vector.extract_strided_slice %14 {offsets = [0, 0], sizes = [8, 768], strides = [1, 1]} : vector<16x768xf32> to vector<8x768xf32>
    %cst_17 = arith.constant dense<0.000000e+00> : vector<768xf32>
    %31 = vector.multi_reduction <add>, %30, %cst_17 [0] : vector<8x768xf32> to vector<768xf32>
    %32 = vector.shape_cast %31 : vector<768xf32> to vector<1x768xf32>
    %cst_18 = arith.constant 8.000000e+00 : f32
    %33 = vector.broadcast %cst_18 : f32 to vector<1x768xf32>
    %34 = arith.divf %32, %33 : vector<1x768xf32>
    %35 = vector.extract_strided_slice %14 {offsets = [8, 0], sizes = [8, 768], strides = [1, 1]} : vector<16x768xf32> to vector<8x768xf32>
    %cst_19 = arith.constant dense<0.000000e+00> : vector<768xf32>
    %36 = vector.multi_reduction <add>, %35, %cst_19 [0] : vector<8x768xf32> to vector<768xf32>
    %37 = vector.shape_cast %36 : vector<768xf32> to vector<1x768xf32>
    %cst_20 = arith.constant 8.000000e+00 : f32
    %38 = vector.broadcast %cst_20 : f32 to vector<1x768xf32>
    %39 = arith.divf %37, %38 : vector<1x768xf32>
    %40 = tpu.concatenate %34, %39 in 0 : vector<1x768xf32>, vector<1x768xf32> -> vector<2x768xf32>
    %c0_21 = arith.constant 0 : index
    %c0_22 = arith.constant 0 : index
    %41 = vector.load %arg7[%c0_21, %c0_22] : memref<2x768xf32, #tpu.memory_space<vmem>>, vector<2x768xf32>
    %42 = vector.extract_strided_slice %41 {offsets = [0, 0], sizes = [1, 768], strides = [1, 1]} : vector<2x768xf32> to vector<1x768xf32>
    %43 = vector.broadcast %42 : vector<1x768xf32> to vector<2x768xf32>
    %44 = arith.mulf %40, %43 : vector<2x768xf32>
    %cst_23 = arith.constant dense<0.000000e+00> : vector<2xf32>
    %45 = vector.multi_reduction <add>, %44, %cst_23 [1] : vector<2x768xf32> to vector<2xf32>
    %46 = vector.shape_cast %45 : vector<2xf32> to vector<2x1xf32>
    %47 = vector.extract_strided_slice %41 {offsets = [1, 0], sizes = [1, 768], strides = [1, 1]} : vector<2x768xf32> to vector<1x768xf32>
    %48 = vector.broadcast %47 : vector<1x768xf32> to vector<2x768xf32>
    %49 = arith.mulf %40, %48 : vector<2x768xf32>
    %cst_24 = arith.constant dense<0.000000e+00> : vector<2xf32>
    %50 = vector.multi_reduction <add>, %49, %cst_24 [1] : vector<2x768xf32> to vector<2xf32>
    %51 = vector.shape_cast %50 : vector<2xf32> to vector<2x1xf32>
    %52 = tpu.concatenate %46, %51 in 1 : vector<2x1xf32>, vector<2x1xf32> -> vector<2x2xf32>
    %c0_25 = arith.constant 0 : index
    %c0_26 = arith.constant 0 : index
    %53 = vector.load %arg8[%c0_25, %c0_26] : memref<1x2xf32, #tpu.memory_space<vmem>>, vector<1x2xf32>
    %54 = vector.broadcast %53 : vector<1x2xf32> to vector<2x2xf32>
    %55 = arith.addf %52, %54 : vector<2x2xf32>
    %cst_27 = arith.constant dense<0xFF800000> : vector<2xf32>
    %56 = vector.multi_reduction <maximumf>, %55, %cst_27 [1] : vector<2x2xf32> to vector<2xf32>
    %57 = vector.shape_cast %56 : vector<2xf32> to vector<2x1xf32>
    %58 = vector.broadcast %57 : vector<2x1xf32> to vector<2x2xf32>
    %59 = arith.subf %55, %58 : vector<2x2xf32>
    %60 = math.exp %59 : vector<2x2xf32>
    %cst_28 = arith.constant dense<0.000000e+00> : vector<2xf32>
    %61 = vector.multi_reduction <add>, %60, %cst_28 [1] : vector<2x2xf32> to vector<2xf32>
    %62 = vector.shape_cast %61 : vector<2xf32> to vector<2x1xf32>
    %63 = vector.broadcast %62 : vector<2x1xf32> to vector<2x2xf32>
    %64 = arith.divf %60, %63 : vector<2x2xf32>
    %c0_29 = arith.constant 0 : index
    %c0_30 = arith.constant 0 : index
    %65 = vector.load %arg10[%c0_29, %c0_30] : memref<2x2xf32, #tpu.memory_space<vmem>>, vector<2x2xf32>
    tpu.vector_store %arg10[%c0_29, %c0_30], %64 {strides = array<i32>} : memref<2x2xf32, #tpu.memory_space<vmem>>, vector<2x2xf32>,
    %66 = tpu.iota {dimensions = array<i32: 1>} : vector<2x2xi32>
    %67 = vector.broadcast %57 : vector<2x1xf32> to vector<2x2xf32>
    %68 = arith.cmpf oeq, %55, %67 : vector<2x2xf32>
    %c2_i32 = arith.constant 2 : i32
    %69 = vector.broadcast %c2_i32 : i32 to vector<2x2xi32>
    %70 = arith.select %68, %66, %69 : vector<2x2xi1>, vector<2x2xi32>
    %cst_31 = arith.constant dense<2147483647> : vector<2xi32>
    %71 = vector.multi_reduction <minsi>, %70, %cst_31 [1] : vector<2x2xi32> to vector<2xi32>
    %72 = vector.shape_cast %71 : vector<2xi32> to vector<2x1xi32>
    %c0_32 = arith.constant 0 : index
    %c0_33 = arith.constant 0 : index
    %73 = vector.load %arg11[%c0_32, %c0_33] : memref<2x1xi32, #tpu.memory_space<vmem>>, vector<2x1xi32>
    tpu.vector_store %arg11[%c0_32, %c0_33], %72 {strides = array<i32>} : memref<2x1xi32, #tpu.memory_space<vmem>>, vector<2x1xi32>,
    return
  }
  func.func @transform_0(%arg0: i32) -> (i32, i32) {
    %c0_i32 = arith.constant 0 : i32
    %c0_i32_0 = arith.constant 0 : i32
    %c0_i32_1 = arith.constant 0 : i32
    return %c0_i32, %c0_i32_0 : i32, i32
  }
  func.func @transform_1(%arg0: i32) -> (i32, i32) {
    %c0_i32 = arith.constant 0 : i32
    %c0_i32_0 = arith.constant 0 : i32
    %c0_i32_1 = arith.constant 0 : i32
    return %c0_i32, %c0_i32_0 : i32, i32
  }
  func.func @transform_2(%arg0: i32) -> (i32, i32) {
    %c0_i32 = arith.constant 0 : i32
    %c0_i32_0 = arith.constant 0 : i32
    %c0_i32_1 = arith.constant 0 : i32
    return %c0_i32, %c0_i32_0 : i32, i32
  }
  func.func @transform_3(%arg0: i32) -> (i32, i32) {
    %c0_i32 = arith.constant 0 : i32
    %c0_i32_0 = arith.constant 0 : i32
    %c0_i32_1 = arith.constant 0 : i32
    return %c0_i32, %c0_i32_0 : i32, i32
  }
  func.func @transform_4(%arg0: i32) -> (i32, i32) {
    %c0_i32 = arith.constant 0 : i32
    %c0_i32_0 = arith.constant 0 : i32
    %c0_i32_1 = arith.constant 0 : i32
    return %c0_i32, %c0_i32_0 : i32, i32
  }
  func.func @transform_5(%arg0: i32) -> (i32, i32) {
    %c0_i32 = arith.constant 0 : i32
    %c0_i32_0 = arith.constant 0 : i32
    %c0_i32_1 = arith.constant 0 : i32
    return %c0_i32, %c0_i32_0 : i32, i32
  }
  func.func @transform_6(%arg0: i32) -> (i32, i32) {
    %c0_i32 = arith.constant 0 : i32
    %c0_i32_0 = arith.constant 0 : i32
    %c0_i32_1 = arith.constant 0 : i32
    return %c0_i32, %c0_i32_0 : i32, i32
  }
  func.func @transform_7(%arg0: i32) -> (i32, i32) {
    %c0_i32 = arith.constant 0 : i32
    %c0_i32_0 = arith.constant 0 : i32
    %c0_i32_1 = arith.constant 0 : i32
    return %c0_i32, %c0_i32_0 : i32, i32
  }
  func.func @transform_8(%arg0: i32) -> (i32, i32) {
    %c0_i32 = arith.constant 0 : i32
    %c0_i32_0 = arith.constant 0 : i32
    %c0_i32_1 = arith.constant 0 : i32
    return %c0_i32, %c0_i32_0 : i32, i32
  }
  func.func @transform_9(%arg0: i32) -> (i32, i32) {
    %c0_i32 = arith.constant 0 : i32
    %c0_i32_0 = arith.constant 0 : i32
    %c0_i32_1 = arith.constant 0 : i32
    return %c0_i32, %c0_i32_0 : i32, i32
  }
  func.func @transform_10(%arg0: i32) -> (i32, i32) {
    %c0_i32 = arith.constant 0 : i32
    %c0_i32_0 = arith.constant 0 : i32
    %c0_i32_1 = arith.constant 0 : i32
    return %c0_i32, %c0_i32_0 : i32, i32
  }
}

</mosaic_0001>

<llo_original>
// kernel: tpu_custom_call.1
$region0: #{tpu_custom_call.1}
  #allocation0 [shape = 'u32[]', space=smem, size = 0x4, offset = 0x4, fixed_abs, tag = 'smem constant byte address 0x4 - core index']
  #allocation1 [shape = 'u32[144,128]{1,0:T(1,128)}', space=vmem, size = 0x12000, scoped, tag = 'internal scratch']
  %s0 = inlined_call_operand.vmem [shape: s32[16,1], index: 0, kind: input, shape index: {}]
  %s1 = inlined_call_operand.hbm [shape: bf16[256,128], index: 1, kind: input, shape index: {}]
  %s2 = inlined_call_operand.hbm [shape: bf16[128,768], index: 2, kind: input, shape index: {}]
  %s3 = inlined_call_operand.vmem [shape: f32[1,768], index: 3, kind: input, shape index: {}]
  %s4 = inlined_call_operand.hbm [shape: bf16[768,256], index: 4, kind: input, shape index: {}]
  %s5 = inlined_call_operand.vmem [shape: f32[1,256], index: 5, kind: input, shape index: {}]
  %s6 = inlined_call_operand.vmem [shape: f32[2,768], index: 6, kind: input, shape index: {}]
  %s7 = inlined_call_operand.vmem [shape: f32[1,2], index: 7, kind: input, shape index: {}]
  %s8 = inlined_call_operand.vmem [shape: s32[16,1], index: 8, kind: output, shape index: {0}]
  %s9 = inlined_call_operand.hbm [shape: f32[2,2], index: 9, kind: output, shape index: {1}]
  %s10 = inlined_call_operand.vmem [shape: s32[2,1], index: 10, kind: output, shape index: {2}]
  %11 = xla_tuple %s8, %s9, %s10
  %s12 = sld [smem:[#allocation0]]
  $region70: #{tpu_custom_call.1} parent=0
    _
  %s14 = ssub.s32 1, %s12
  %s15 = scalar_select 0, %s14, %s12
  $region1: #{tpu_custom_call.1} parent=0
    #allocation2 [shape = 'u8[65536]{0}', space=vmem, size = 0x10000, scoped, tag = 'input window, operand 1, single buffered']
    #allocation3 [shape = 's32[1]{0}', space=sflag, size = 0x4, scoped, tag = 'scoped memory for tpu_custom_call.1']
    #allocation4 [shape = 's32[1]{0}', space=sflag, size = 0x4, scoped, tag = 'scoped memory for tpu_custom_call.1']
    #allocation5 [shape = 'u8[196608]{0}', space=vmem, size = 0x30000, scoped, tag = 'input window, operand 2, single buffered']
    #allocation6 [shape = 's32[1]{0}', space=sflag, size = 0x4, scoped, tag = 'scoped memory for tpu_custom_call.1']
    #allocation7 [shape = 'u8[393216]{0}', space=vmem, size = 0x60000, scoped, tag = 'input window, operand 4, single buffered']
    #allocation8 [shape = 'u8[1024]{0}', space=vmem, size = 0x400, scoped, tag = 'output window, operand 1, single buffered']
    %16 = vsyncpa [#allocation3], 0
    %17 = vsyncpa [#allocation6], 0
    %18 = vsyncpa [#allocation4], 0
    // Predicated region
    $region2: #{tpu_custom_call.1} parent=1 // pred_check
      _
    $region3: #{tpu_custom_call.1} parent=1 // pred_check_branch
      %20 = sbr.rel (0) target = $region5
    $region4: #{tpu_custom_call.1} parent=1 // pred_region
      _
    $region5: #{tpu_custom_call.1} parent=1 // pred_fallthru
      _
    // Predicated region
    $region6: #{tpu_custom_call.1} parent=1 // pred_check
      _
    $region7: #{tpu_custom_call.1} parent=1 // pred_check_branch
      %22 = sbr.rel (0) target = $region9
    $region8: #{tpu_custom_call.1} parent=1 // pred_region
      %s24 = ssub.s32 2048, 2048
      %25 = vsyncadd [#allocation3], %s24
      %s26 = sshll.u32 [#allocation2], 4
      %s27 = int_to_ptr.vmem [resolvable:$true] %s26
      %32 = dma.hbm_to_vmem [thread:$0]  %s1, 2048, %s27, [#allocation3], 64, 64, 4
    $region9: #{tpu_custom_call.1} parent=1 // pred_fallthru
      _
    // Predicated region
    $region10: #{tpu_custom_call.1} parent=1 // pred_check
      _
    $region11: #{tpu_custom_call.1} parent=1 // pred_check_branch
      %34 = sbr.rel (0) target = $region13
    $region12: #{tpu_custom_call.1} parent=1 // pred_region
      %s36 = ssub.s32 6144, 6144
      %37 = vsyncadd [#allocation6], %s36
      %s38 = sshll.u32 [#allocation5], 4
      %s39 = int_to_ptr.vmem [resolvable:$true] %s38
      %44 = dma.hbm_to_vmem [thread:$0]  %s2, 6144, %s39, [#allocation6], 384, 384, 24
    $region13: #{tpu_custom_call.1} parent=1 // pred_fallthru
      _
    // Predicated region
    $region14: #{tpu_custom_call.1} parent=1 // pred_check
      _
    $region15: #{tpu_custom_call.1} parent=1 // pred_check_branch
      %46 = sbr.rel (0) target = $region17
    $region16: #{tpu_custom_call.1} parent=1 // pred_region
      _
    $region17: #{tpu_custom_call.1} parent=1 // pred_fallthru
      _
    // Predicated region
    $region18: #{tpu_custom_call.1} parent=1 // pred_check
      _
    $region19: #{tpu_custom_call.1} parent=1 // pred_check_branch
      %48 = sbr.rel (0) target = $region21
    $region20: #{tpu_custom_call.1} parent=1 // pred_region
      %s50 = ssub.s32 12288, 12288
      %51 = vsyncadd [#allocation6], %s50
      %s52 = sshll.u32 [#allocation7], 4
      %s53 = int_to_ptr.vmem [resolvable:$true] %s52
      %58 = dma.hbm_to_vmem [thread:$0]  %s4, 12288, %s53, [#allocation6], 128, 128, 8
    $region21: #{tpu_custom_call.1} parent=1 // pred_fallthru
      _
    // Predicated region
    $region22: #{tpu_custom_call.1} parent=1 // pred_check
      _
    $region23: #{tpu_custom_call.1} parent=1 // pred_check_branch
      %60 = sbr.rel (0) target = $region25
    $region24: #{tpu_custom_call.1} parent=1 // pred_region
      _
    $region25: #{tpu_custom_call.1} parent=1 // pred_fallthru
      _
    // Predicated region
    $region26: #{tpu_custom_call.1} parent=1 // pred_check
      _
    $region27: #{tpu_custom_call.1} parent=1 // pred_check_branch
      %62 = sbr.rel (0) target = $region29
    $region28: #{tpu_custom_call.1} parent=1 // pred_region
      _
    $region29: #{tpu_custom_call.1} parent=1 // pred_fallthru
      _
    // Predicated region
    $region30: #{tpu_custom_call.1} parent=1 // pred_check
      _
    $region31: #{tpu_custom_call.1} parent=1 // pred_check_branch
      %64 = sbr.rel (0) target = $region33
    $region32: #{tpu_custom_call.1} parent=1 // pred_region
      _
    $region33: #{tpu_custom_call.1} parent=1 // pred_fallthru
      _
    // Predicated region
    $region34: #{tpu_custom_call.1} parent=1 // pred_check
      _
    $region35: #{tpu_custom_call.1} parent=1 // pred_check_branch
      %66 = sbr.rel (0) target = $region37
    $region36: #{tpu_custom_call.1} parent=1 // pred_region
      %67 = dma.done [#allocation3], 2048
    $region37: #{tpu_custom_call.1} parent=1 // pred_fallthru
      _
    // Predicated region
    $region38: #{tpu_custom_call.1} parent=1 // pred_check
      _
    $region39: #{tpu_custom_call.1} parent=1 // pred_check_branch
      %69 = sbr.rel (0) target = $region41
    $region40: #{tpu_custom_call.1} parent=1 // pred_region
      %70 = dma.done [#allocation6], 6144
    $region41: #{tpu_custom_call.1} parent=1 // pred_fallthru
      _
    // Predicated region
    $region42: #{tpu_custom_call.1} parent=1 // pred_check
      _
    $region43: #{tpu_custom_call.1} parent=1 // pred_check_branch
      %72 = sbr.rel (0) target = $region45
    $region44: #{tpu_custom_call.1} parent=1 // pred_region
      %73 = dma.done [#allocation6], 12288
    $region45: #{tpu_custom_call.1} parent=1 // pred_fallthru
      _
    %v75 = vld [vmem:[%s0] sm:$0xff]
    %v76 = vld [vmem:[%s0 + $0x8] sm:$0xff]
    %v77 = vlaneseq
    %v78 = vand.u32 %v77, 127
    %v79 = vadd.s32 %v78, 128
    %80 = vset.pattern.permute.xlu0 0
    %81 = vperm.xlu0 %80, %v75
    %v82 = vpop.permute.xlu0 %81
    %83 = vset.pattern.permute.xlu0 0
    %84 = vperm.xlu0 %83, %v76
    %v85 = vpop.permute.xlu0 %84
    %vm86 = vcmp.eq.s32.totalorder %v78, %v82
    %vm87 = vcmp.eq.s32.totalorder %v79, %v82
    %vm88 = vcmp.eq.s32.totalorder %v78, %v85
    %vm89 = vcmp.eq.s32.totalorder %v79, %v85
    %v90 = vsel %vm86, 1, 0
    %v91 = vsel %vm87, 1, 0
    %v92 = vsel %vm88, 1, 0
    %v93 = vsel %vm89, 1, 0
    %v94 = vcvt.s32.f32 %v90
    %v95 = vcvt.s32.f32 %v91
    %v96 = vcvt.s32.f32 %v92
    %v97 = vcvt.s32.f32 %v93
    %v98 = vpack.c.bf16 %v96, %v94
    %v99 = vpack.c.bf16 %v97, %v95
    %v100 = vld [vmem:[#allocation2] sm:$0xf]
    %v101 = vld [vmem:[#allocation2 + $0x4] sm:$0xf]
    %v102 = vld [vmem:[#allocation2 + $0x8] sm:$0xf]
    %v103 = vld [vmem:[#allocation2 + $0xc] sm:$0xf]
    %v104 = vld [vmem:[#allocation2 + $0x10] sm:$0xf]
    %v105 = vld [vmem:[#allocation2 + $0x14] sm:$0xf]
    %v106 = vld [vmem:[#allocation2 + $0x18] sm:$0xf]
    %v107 = vld [vmem:[#allocation2 + $0x1c] sm:$0xf]
    %v108 = vld [vmem:[#allocation2 + $0x20] sm:$0xf]
    %v109 = vld [vmem:[#allocation2 + $0x24] sm:$0xf]
    %v110 = vld [vmem:[#allocation2 + $0x28] sm:$0xf]
    %v111 = vld [vmem:[#allocation2 + $0x2c] sm:$0xf]
    %v112 = vld [vmem:[#allocation2 + $0x30] sm:$0xf]
    %v113 = vld [vmem:[#allocation2 + $0x34] sm:$0xf]
    %v114 = vld [vmem:[#allocation2 + $0x38] sm:$0xf]
    %v115 = vld [vmem:[#allocation2 + $0x3c] sm:$0xf]
    %v116 = vld [vmem:[#allocation2 + $0x40] sm:$0xf]
    %v117 = vld [vmem:[#allocation2 + $0x44] sm:$0xf]
    %v118 = vld [vmem:[#allocation2 + $0x48] sm:$0xf]
    %v119 = vld [vmem:[#allocation2 + $0x4c] sm:$0xf]
    %v120 = vld [vmem:[#allocation2 + $0x50] sm:$0xf]
    %v121 = vld [vmem:[#allocation2 + $0x54] sm:$0xf]
    %v122 = vld [vmem:[#allocation2 + $0x58] sm:$0xf]
    %v123 = vld [vmem:[#allocation2 + $0x5c] sm:$0xf]
    %v124 = vld [vmem:[#allocation2 + $0x60] sm:$0xf]
    %v125 = vld [vmem:[#allocation2 + $0x64] sm:$0xf]
    %v126 = vld [vmem:[#allocation2 + $0x68] sm:$0xf]
    %v127 = vld [vmem:[#allocation2 + $0x6c] sm:$0xf]
    %v128 = vld [vmem:[#allocation2 + $0x70] sm:$0xf]
    %v129 = vld [vmem:[#allocation2 + $0x74] sm:$0xf]
    %v130 = vld [vmem:[#allocation2 + $0x78] sm:$0xf]
    %v131 = vld [vmem:[#allocation2 + $0x7c] sm:$0xf]
    %v164 = vunpack.c.l.b16 %v100
    %v165 = vunpack.c.l.b16 %v101
    %v166 = vunpack.c.l.b16 %v102
    %v167 = vunpack.c.l.b16 %v103
    %v168 = vunpack.c.l.b16 %v104
    %v169 = vunpack.c.l.b16 %v105
    %v170 = vunpack.c.l.b16 %v106
    %v171 = vunpack.c.l.b16 %v107
    %v172 = vunpack.c.l.b16 %v108
    %v173 = vunpack.c.l.b16 %v109
    %v174 = vunpack.c.l.b16 %v110
    %v175 = vunpack.c.l.b16 %v111
    %v176 = vunpack.c.l.b16 %v112
    %v177 = vunpack.c.l.b16 %v113
    %v178 = vunpack.c.l.b16 %v114
    %v179 = vunpack.c.l.b16 %v115
    %v180 = vunpack.c.l.b16 %v116
    %v181 = vunpack.c.l.b16 %v117
    %v182 = vunpack.c.l.b16 %v118
    %v183 = vunpack.c.l.b16 %v119
    %v184 = vunpack.c.l.b16 %v120
    %v185 = vunpack.c.l.b16 %v121
    %v186 = vunpack.c.l.b16 %v122
    %v187 = vunpack.c.l.b16 %v123
    %v188 = vunpack.c.l.b16 %v124
    %v189 = vunpack.c.l.b16 %v125
    %v190 = vunpack.c.l.b16 %v126
    %v191 = vunpack.c.l.b16 %v127
    %v192 = vunpack.c.l.b16 %v128
    %v193 = vunpack.c.l.b16 %v129
    %v194 = vunpack.c.l.b16 %v130
    %v195 = vunpack.c.l.b16 %v131
    %v196 = vpack.c.b16 %v165, %v164
    %v197 = vpack.c.b16 %v167, %v166
    %v198 = vpack.c.b16 %v169, %v168
    %v199 = vpack.c.b16 %v171, %v170
    %v200 = vpack.c.b16 %v173, %v172
    %v201 = vpack.c.b16 %v175, %v174
    %v202 = vpack.c.b16 %v177, %v176
    %v203 = vpack.c.b16 %v179, %v178
    %v204 = vpack.c.b16 %v181, %v180
    %v205 = vpack.c.b16 %v183, %v182
    %v206 = vpack.c.b16 %v185, %v184
    %v207 = vpack.c.b16 %v187, %v186
    %v208 = vpack.c.b16 %v189, %v188
    %v209 = vpack.c.b16 %v191, %v190
    %v210 = vpack.c.b16 %v193, %v192
    %v211 = vpack.c.b16 %v195, %v194
    %228 = vmatprep.subr.bf16.mxu0 0
    %229 = vmatpush1.bf16.msra.mxu0 %v203
    %230 = vmatprep.subr.bf16.mxu0 0
    %231 = vmatpush1.bf16.msra.mxu0 %v202
    %232 = vmatprep.subr.bf16.mxu0 0
    %233 = vmatpush1.bf16.msra.mxu0 %v201
    %234 = vmatprep.subr.bf16.mxu0 0
    %235 = vmatpush1.bf16.msra.mxu0 %v200
    %236 = vmatprep.subr.bf16.mxu0 0
    %237 = vmatpush1.bf16.msra.mxu0 %v199
    %238 = vmatprep.subr.bf16.mxu0 0
    %239 = vmatpush1.bf16.msra.mxu0 %v198
    %240 = vmatprep.subr.bf16.mxu0 0
    %241 = vmatpush1.bf16.msra.mxu0 %v197
    %242 = vmatprep.subr.bf16.mxu0 0
    %243 = vmatpush1.bf16.msra.mxu0 %v196
    %244 = vmatprep.subr.bf16.mxu0 0
    %245 = vmatpush2.bf16.msra.mxu0 %v211
    %246 = vmatprep.subr.bf16.mxu0 0
    %247 = vmatpush2.bf16.msra.mxu0 %v210
    %248 = vmatprep.subr.bf16.mxu0 0
    %249 = vmatpush2.bf16.msra.mxu0 %v209
    %250 = vmatprep.subr.bf16.mxu0 0
    %251 = vmatpush2.bf16.msra.mxu0 %v208
    %252 = vmatprep.subr.bf16.mxu0 0
    %253 = vmatpush2.bf16.msra.mxu0 %v207
    %254 = vmatprep.subr.bf16.mxu0 0
    %255 = vmatpush2.bf16.msra.mxu0 %v206
    %256 = vmatprep.subr.bf16.mxu0 0
    %257 = vmatpush2.bf16.msra.mxu0 %v205
    %258 = vmatprep.subr.bf16.mxu0 0
    %259 = vmatpush2.bf16.msra.mxu0 %v204
    %260 = vmatprep.mubr.bf16.mxu0 %v99
    %261 = vmatmul.mubr.bf16.gmra.mxu0 %v98
    %v262 = vpop.f32.mrf.mxu0
    %v263 = vadd.f32 0.0, %v262
    %v264 = vpop.f32.mrf.mxu0
    %v265 = vpop.f32.mrf.mxu0
    %v266 = vadd.f32 0.0, %v265
    %v267 = vpop.f32.mrf.mxu0
    %268 = vdwg.mxu0
    %v269 = vpack.c.bf16 %v266, %v263
    %v270 = vld [vmem:[#allocation5] sm:$0xff]
    %v271 = vld [vmem:[#allocation5 + $0x8] sm:$0xff]
    %v272 = vld [vmem:[#allocation5 + $0x10] sm:$0xff]
    %v273 = vld [vmem:[#allocation5 + $0x18] sm:$0xff]
    %v274 = vld [vmem:[#allocation5 + $0x20] sm:$0xff]
    %v275 = vld [vmem:[#allocation5 + $0x28] sm:$0xff]
    %v276 = vld [vmem:[#allocation5 + $0x30] sm:$0xff]
    %v277 = vld [vmem:[#allocation5 + $0x38] sm:$0xff]
    %v278 = vld [vmem:[#allocation5 + $0x40] sm:$0xff]
    %v279 = vld [vmem:[#allocation5 + $0x48] sm:$0xff]
    %v280 = vld [vmem:[#allocation5 + $0x50] sm:$0xff]
    %v281 = vld [vmem:[#allocation5 + $0x58] sm:$0xff]
    %v282 = vld [vmem:[#allocation5 + $0x60] sm:$0xff]
    %v283 = vld [vmem:[#allocation5 + $0x68] sm:$0xff]
    %v284 = vld [vmem:[#allocation5 + $0x70] sm:$0xff]
    %v285 = vld [vmem:[#allocation5 + $0x78] sm:$0xff]
    %v286 = vld [vmem:[#allocation5 + $0x80] sm:$0xff]
    %v287 = vld [vmem:[#allocation5 + $0x88] sm:$0xff]
    %v288 = vld [vmem:[#allocation5 + $0x90] sm:$0xff]
    %v289 = vld [vmem:[#allocation5 + $0x98] sm:$0xff]
    %v290 = vld [vmem:[#allocation5 + $0xa0] sm:$0xff]
    %v291 = vld [vmem:[#allocation5 + $0xa8] sm:$0xff]
    %v292 = vld [vmem:[#allocation5 + $0xb0] sm:$0xff]
    %v293 = vld [vmem:[#allocation5 + $0xb8] sm:$0xff]
    %v294 = vld [vmem:[#allocation5 + $0xc0] sm:$0xff]
    %v295 = vld [vmem:[#allocation5 + $0xc8] sm:$0xff]
    %v296 = vld [vmem:[#allocation5 + $0xd0] sm:$0xff]
    %v297 = vld [vmem:[#allocation5 + $0xd8] sm:$0xff]
    %v298 = vld [vmem:[#allocation5 + $0xe0] sm:$0xff]
    %v299 = vld [vmem:[#allocation5 + $0xe8] sm:$0xff]
    %v300 = vld [vmem:[#allocation5 + $0xf0] sm:$0xff]
    %v301 = vld [vmem:[#allocation5 + $0xf8] sm:$0xff]
    %v302 = vld [vmem:[#allocation5 + $0x100] sm:$0xff]
    %v303 = vld [vmem:[#allocation5 + $0x108] sm:$0xff]
    %v304 = vld [vmem:[#allocation5 + $0x110] sm:$0xff]
    %v305 = vld [vmem:[#allocation5 + $0x118] sm:$0xff]
    %v306 = vld [vmem:[#allocation5 + $0x120] sm:$0xff]
    %v307 = vld [vmem:[#allocation5 + $0x128] sm:$0xff]
    %v308 = vld [vmem:[#allocation5 + $0x130] sm:$0xff]
    %v309 = vld [vmem:[#allocation5 + $0x138] sm:$0xff]
    %v310 = vld [vmem:[#allocation5 + $0x140] sm:$0xff]
    %v311 = vld [vmem:[#allocation5 + $0x148] sm:$0xff]
    %v312 = vld [vmem:[#allocation5 + $0x150] sm:$0xff]
    %v313 = vld [vmem:[#allocation5 + $0x158] sm:$0xff]
    %v314 = vld [vmem:[#allocation5 + $0x160] sm:$0xff]
    %v315 = vld [vmem:[#allocation5 + $0x168] sm:$0xff]
    %v316 = vld [vmem:[#allocation5 + $0x170] sm:$0xff]
    %v317 = vld [vmem:[#allocation5 + $0x178] sm:$0xff]
    %v318 = vld [vmem:[%s3] sm:$0x3f]
    %v320 = vlaneseq
    %v321 = vshrl.u32 %v320, 7
    %v322 = vsub.s32 0, %v321
    %v323 = vrot.slane %v318, %v322
    %v324 = vlaneseq
    %v325 = vshrl.u32 %v324, 7
    %v326 = vsub.s32 1, %v325
    %v327 = vrot.slane %v318, %v326
    %v328 = vlaneseq
    %v329 = vshrl.u32 %v328, 7
    %v330 = vsub.s32 2, %v329
    %v331 = vrot.slane %v318, %v330
    %v332 = vlaneseq
    %v333 = vshrl.u32 %v332, 7
    %v334 = vsub.s32 3, %v333
    %v335 = vrot.slane %v318, %v334
    %v336 = vlaneseq
    %v337 = vshrl.u32 %v336, 7
    %v338 = vsub.s32 4, %v337
    %v339 = vrot.slane %v318, %v338
    %v340 = vlaneseq
    %v341 = vshrl.u32 %v340, 7
    %v342 = vsub.s32 5, %v341
    %v343 = vrot.slane %v318, %v342
    %v398 = vunpack.c.l.b16 %v270
    %v399 = vunpack.c.h.b16 %v270
    %v400 = vunpack.c.l.b16 %v271
    %v401 = vunpack.c.h.b16 %v271
    %v402 = vunpack.c.l.b16 %v272
    %v403 = vunpack.c.h.b16 %v272
    %v404 = vunpack.c.l.b16 %v273
    %v405 = vunpack.c.h.b16 %v273
    %v406 = vunpack.c.l.b16 %v274
    %v407 = vunpack.c.h.b16 %v274
    %v408 = vunpack.c.l.b16 %v275
    %v409 = vunpack.c.h.b16 %v275
    %v410 = vunpack.c.l.b16 %v276
    %v411 = vunpack.c.h.b16 %v276
    %v412 = vunpack.c.l.b16 %v277
    %v413 = vunpack.c.h.b16 %v277
    %v414 = vunpack.c.l.b16 %v278
    %v415 = vunpack.c.h.b16 %v278
    %v416 = vunpack.c.l.b16 %v279
    %v417 = vunpack.c.h.b16 %v279
    %v418 = vunpack.c.l.b16 %v280
    %v419 = vunpack.c.h.b16 %v280
    %v420 = vunpack.c.l.b16 %v281
    %v421 = vunpack.c.h.b16 %v281
    %v422 = vunpack.c.l.b16 %v282
    %v423 = vunpack.c.h.b16 %v282
    %v424 = vunpack.c.l.b16 %v283
    %v425 = vunpack.c.h.b16 %v283
    %v426 = vunpack.c.l.b16 %v284
    %v427 = vunpack.c.h.b16 %v284
    %v428 = vunpack.c.l.b16 %v285
    %v429 = vunpack.c.h.b16 %v285
    %v430 = vunpack.c.l.b16 %v286
    %v431 = vunpack.c.h.b16 %v286
    %v432 = vunpack.c.l.b16 %v287
    %v433 = vunpack.c.h.b16 %v287
    %v434 = vunpack.c.l.b16 %v288
    %v435 = vunpack.c.h.b16 %v288
    %v436 = vunpack.c.l.b16 %v289
    %v437 = vunpack.c.h.b16 %v289
    %v438 = vunpack.c.l.b16 %v290
    %v439 = vunpack.c.h.b16 %v290
    %v440 = vunpack.c.l.b16 %v291
    %v441 = vunpack.c.h.b16 %v291
    %v442 = vunpack.c.l.b16 %v292
    %v443 = vunpack.c.h.b16 %v292
    %v444 = vunpack.c.l.b16 %v293
    %v445 = vunpack.c.h.b16 %v293
    %v446 = vunpack.c.l.b16 %v294
    %v447 = vunpack.c.h.b16 %v294
    %v448 = vunpack.c.l.b16 %v295
    %v449 = vunpack.c.h.b16 %v295
    %v450 = vunpack.c.l.b16 %v296
    %v451 = vunpack.c.h.b16 %v296
    %v452 = vunpack.c.l.b16 %v297
    %v453 = vunpack.c.h.b16 %v297
    %v454 = vunpack.c.l.b16 %v298
    %v455 = vunpack.c.h.b16 %v298
    %v456 = vunpack.c.l.b16 %v299
    %v457 = vunpack.c.h.b16 %v299
    %v458 = vunpack.c.l.b16 %v300
    %v459 = vunpack.c.h.b16 %v300
    %v460 = vunpack.c.l.b16 %v301
    %v461 = vunpack.c.h.b16 %v301
    %v462 = vunpack.c.l.b16 %v302
    %v463 = vunpack.c.h.b16 %v302
    %v464 = vunpack.c.l.b16 %v303
    %v465 = vunpack.c.h.b16 %v303
    %v466 = vunpack.c.l.b16 %v304
    %v467 = vunpack.c.h.b16 %v304
    %v468 = vunpack.c.l.b16 %v305
    %v469 = vunpack.c.h.b16 %v305
    %v470 = vunpack.c.l.b16 %v306
    %v471 = vunpack.c.h.b16 %v306
    %v472 = vunpack.c.l.b16 %v307
    %v473 = vunpack.c.h.b16 %v307
    %v474 = vunpack.c.l.b16 %v308
    %v475 = vunpack.c.h.b16 %v308
    %v476 = vunpack.c.l.b16 %v309
    %v477 = vunpack.c.h.b16 %v309
    %v478 = vunpack.c.l.b16 %v310
    %v479 = vunpack.c.h.b16 %v310
    %v480 = vunpack.c.l.b16 %v311
    %v481 = vunpack.c.h.b16 %v311
    %v482 = vunpack.c.l.b16 %v312
    %v483 = vunpack.c.h.b16 %v312
    %v484 = vunpack.c.l.b16 %v313
    %v485 = vunpack.c.h.b16 %v313
    %v486 = vunpack.c.l.b16 %v314
    %v487 = vunpack.c.h.b16 %v314
    %v488 = vunpack.c.l.b16 %v315
    %v489 = vunpack.c.h.b16 %v315
    %v490 = vunpack.c.l.b16 %v316
    %v491 = vunpack.c.h.b16 %v316
    %v492 = vunpack.c.l.b16 %v317
    %v493 = vunpack.c.h.b16 %v317
    %v494 = vpack.c.b16 %v404, %v398
    %v495 = vpack.c.b16 %v405, %v399
    %v496 = vpack.c.b16 %v406, %v400
    %v497 = vpack.c.b16 %v407, %v401
    %v498 = vpack.c.b16 %v408, %v402
    %v499 = vpack.c.b16 %v409, %v403
    %v500 = vpack.c.b16 %v416, %v410
    %v501 = vpack.c.b16 %v417, %v411
    %v502 = vpack.c.b16 %v418, %v412
    %v503 = vpack.c.b16 %v419, %v413
    %v504 = vpack.c.b16 %v420, %v414
    %v505 = vpack.c.b16 %v421, %v415
    %v506 = vpack.c.b16 %v428, %v422
    %v507 = vpack.c.b16 %v429, %v423
    %v508 = vpack.c.b16 %v430, %v424
    %v509 = vpack.c.b16 %v431, %v425
    %v510 = vpack.c.b16 %v432, %v426
    %v511 = vpack.c.b16 %v433, %v427
    %v512 = vpack.c.b16 %v440, %v434
    %v513 = vpack.c.b16 %v441, %v435
    %v514 = vpack.c.b16 %v442, %v436
    %v515 = vpack.c.b16 %v443, %v437
    %v516 = vpack.c.b16 %v444, %v438
    %v517 = vpack.c.b16 %v445, %v439
    %v518 = vpack.c.b16 %v452, %v446
    %v519 = vpack.c.b16 %v453, %v447
    %v520 = vpack.c.b16 %v454, %v448
    %v521 = vpack.c.b16 %v455, %v449
    %v522 = vpack.c.b16 %v456, %v450
    %v523 = vpack.c.b16 %v457, %v451
    %v524 = vpack.c.b16 %v464, %v458
    %v525 = vpack.c.b16 %v465, %v459
    %v526 = vpack.c.b16 %v466, %v460
    %v527 = vpack.c.b16 %v467, %v461
    %v528 = vpack.c.b16 %v468, %v462
    %v529 = vpack.c.b16 %v469, %v463
    %v530 = vpack.c.b16 %v476, %v470
    %v531 = vpack.c.b16 %v477, %v471
    %v532 = vpack.c.b16 %v478, %v472
    %v533 = vpack.c.b16 %v479, %v473
    %v534 = vpack.c.b16 %v480, %v474
    %v535 = vpack.c.b16 %v481, %v475
    %v536 = vpack.c.b16 %v488, %v482
    %v537 = vpack.c.b16 %v489, %v483
    %v538 = vpack.c.b16 %v490, %v484
    %v539 = vpack.c.b16 %v491, %v485
    %v540 = vpack.c.b16 %v492, %v486
    %v541 = vpack.c.b16 %v493, %v487
    %590 = vmatprep.subr.bf16.mxu0 %v537
    %591 = vmatpush1.bf16.msra.mxu0 %v536
    %592 = vmatprep.subr.bf16.mxu0 %v531
    %593 = vmatpush1.bf16.msra.mxu0 %v530
    %594 = vmatprep.subr.bf16.mxu0 %v525
    %595 = vmatpush1.bf16.msra.mxu0 %v524
    %596 = vmatprep.subr.bf16.mxu0 %v519
    %597 = vmatpush1.bf16.msra.mxu0 %v518
    %598 = vmatprep.subr.bf16.mxu0 %v513
    %599 = vmatpush1.bf16.msra.mxu0 %v512
    %600 = vmatprep.subr.bf16.mxu0 %v507
    %601 = vmatpush1.bf16.msra.mxu0 %v506
    %602 = vmatprep.subr.bf16.mxu0 %v501
    %603 = vmatpush1.bf16.msra.mxu0 %v500
    %604 = vmatprep.subr.bf16.mxu0 %v495
    %605 = vmatpush1.bf16.msra.mxu0 %v494
    %606 = vmatprep.subr.bf16.mxu0 0
    %607 = vmatpush2.bf16.msra.mxu0 0
    %608 = vmatprep.subr.bf16.mxu0 0
    %609 = vmatpush2.bf16.msra.mxu0 0
    %610 = vmatprep.subr.bf16.mxu0 0
    %611 = vmatpush2.bf16.msra.mxu0 0
    %612 = vmatprep.subr.bf16.mxu0 0
    %613 = vmatpush2.bf16.msra.mxu0 0
    %614 = vmatprep.subr.bf16.mxu0 0
    %615 = vmatpush2.bf16.msra.mxu0 0
    %616 = vmatprep.subr.bf16.mxu0 0
    %617 = vmatpush2.bf16.msra.mxu0 0
    %618 = vmatprep.subr.bf16.mxu0 0
    %619 = vmatpush2.bf16.msra.mxu0 0
    %620 = vmatprep.subr.bf16.mxu0 0
    %621 = vmatpush2.bf16.msra.mxu0 0
    %622 = vmatprep.mubr.bf16.mxu0 0
    %623 = vmatmul.mubr.bf16.gmra.mxu0 %v269
    %v624 = vpop.f32.mrf.mxu0
    %v625 = vadd.f32 %v323, %v624
    %v626 = vpop.f32.mrf.mxu0
    %v627 = vadd.f32 %v327, %v626
    %v628 = vpop.f32.mrf.mxu0
    %v629 = vadd.f32 %v323, %v628
    %v630 = vpop.f32.mrf.mxu0
    %v631 = vadd.f32 %v327, %v630
    %632 = vdwg.mxu0
    %633 = vmatprep.subr.bf16.mxu0 %v539
    %634 = vmatpush1.bf16.msra.mxu0 %v538
    %635 = vmatprep.subr.bf16.mxu0 %v533
    %636 = vmatpush1.bf16.msra.mxu0 %v532
    %637 = vmatprep.subr.bf16.mxu0 %v527
    %638 = vmatpush1.bf16.msra.mxu0 %v526
    %639 = vmatprep.subr.bf16.mxu0 %v521
    %640 = vmatpush1.bf16.msra.mxu0 %v520
    %641 = vmatprep.subr.bf16.mxu0 %v515
    %642 = vmatpush1.bf16.msra.mxu0 %v514
    %643 = vmatprep.subr.bf16.mxu0 %v509
    %644 = vmatpush1.bf16.msra.mxu0 %v508
    %645 = vmatprep.subr.bf16.mxu0 %v503
    %646 = vmatpush1.bf16.msra.mxu0 %v502
    %647 = vmatprep.subr.bf16.mxu0 %v497
    %648 = vmatpush1.bf16.msra.mxu0 %v496
    %649 = vmatprep.subr.bf16.mxu0 0
    %650 = vmatpush2.bf16.msra.mxu0 0
    %651 = vmatprep.subr.bf16.mxu0 0
    %652 = vmatpush2.bf16.msra.mxu0 0
    %653 = vmatprep.subr.bf16.mxu0 0
    %654 = vmatpush2.bf16.msra.mxu0 0
    %655 = vmatprep.subr.bf16.mxu0 0
    %656 = vmatpush2.bf16.msra.mxu0 0
    %657 = vmatprep.subr.bf16.mxu0 0
    %658 = vmatpush2.bf16.msra.mxu0 0
    %659 = vmatprep.subr.bf16.mxu0 0
    %660 = vmatpush2.bf16.msra.mxu0 0
    %661 = vmatprep.subr.bf16.mxu0 0
    %662 = vmatpush2.bf16.msra.mxu0 0
    %663 = vmatprep.subr.bf16.mxu0 0
    %664 = vmatpush2.bf16.msra.mxu0 0
    %665 = vmatprep.mubr.bf16.mxu0 0
    %666 = vmatmul.mubr.bf16.gmra.mxu0 %v269
    %v667 = vpop.f32.mrf.mxu0
    %v668 = vadd.f32 %v331, %v667
    %v669 = vpop.f32.mrf.mxu0
    %v670 = vadd.f32 %v335, %v669
    %v671 = vpop.f32.mrf.mxu0
    %v672 = vadd.f32 %v331, %v671
    %v673 = vpop.f32.mrf.mxu0
    %v674 = vadd.f32 %v335, %v673
    %675 = vdwg.mxu0
    %676 = vmatprep.subr.bf16.mxu0 %v541
    %677 = vmatpush1.bf16.msra.mxu0 %v540
    %678 = vmatprep.subr.bf16.mxu0 %v535
    %679 = vmatpush1.bf16.msra.mxu0 %v534
    %680 = vmatprep.subr.bf16.mxu0 %v529
    %681 = vmatpush1.bf16.msra.mxu0 %v528
    %682 = vmatprep.subr.bf16.mxu0 %v523
    %683 = vmatpush1.bf16.msra.mxu0 %v522
    %684 = vmatprep.subr.bf16.mxu0 %v517
    %685 = vmatpush1.bf16.msra.mxu0 %v516
    %686 = vmatprep.subr.bf16.mxu0 %v511
    %687 = vmatpush1.bf16.msra.mxu0 %v510
    %688 = vmatprep.subr.bf16.mxu0 %v505
    %689 = vmatpush1.bf16.msra.mxu0 %v504
    %690 = vmatprep.subr.bf16.mxu0 %v499
    %691 = vmatpush1.bf16.msra.mxu0 %v498
    %692 = vmatprep.subr.bf16.mxu0 0
    %693 = vmatpush2.bf16.msra.mxu0 0
    %694 = vmatprep.subr.bf16.mxu0 0
    %695 = vmatpush2.bf16.msra.mxu0 0
    %696 = vmatprep.subr.bf16.mxu0 0
    %697 = vmatpush2.bf16.msra.mxu0 0
    %698 = vmatprep.subr.bf16.mxu0 0
    %699 = vmatpush2.bf16.msra.mxu0 0
    %700 = vmatprep.subr.bf16.mxu0 0
    %701 = vmatpush2.bf16.msra.mxu0 0
    %702 = vmatprep.subr.bf16.mxu0 0
    %703 = vmatpush2.bf16.msra.mxu0 0
    %704 = vmatprep.subr.bf16.mxu0 0
    %705 = vmatpush2.bf16.msra.mxu0 0
    %706 = vmatprep.subr.bf16.mxu0 0
    %707 = vmatpush2.bf16.msra.mxu0 0
    %708 = vmatprep.mubr.bf16.mxu0 0
    %709 = vmatmul.mubr.bf16.gmra.mxu0 %v269
    %v710 = vpop.f32.mrf.mxu0
    %v711 = vadd.f32 %v339, %v710
    %v712 = vpop.f32.mrf.mxu0
    %v713 = vadd.f32 %v343, %v712
    %v714 = vpop.f32.mrf.mxu0
    %v715 = vadd.f32 %v339, %v714
    %v716 = vpop.f32.mrf.mxu0
    %v717 = vadd.f32 %v343, %v716
    %718 = vdwg.mxu0
    %v719 = vpack.c.bf16 %v629, %v625
    %v720 = vpack.c.bf16 %v631, %v627
    %v721 = vpack.c.bf16 %v672, %v668
    %v722 = vpack.c.bf16 %v674, %v670
    %v723 = vpack.c.bf16 %v715, %v711
    %v724 = vpack.c.bf16 %v717, %v713
    %v725 = vld [vmem:[#allocation7] sm:$0xff]
    %v726 = vld [vmem:[#allocation7 + $0x8] sm:$0xff]
    %v727 = vld [vmem:[#allocation7 + $0x10] sm:$0xff]
    %v728 = vld [vmem:[#allocation7 + $0x18] sm:$0xff]
    %v729 = vld [vmem:[#allocation7 + $0x20] sm:$0xff]
    %v730 = vld [vmem:[#allocation7 + $0x28] sm:$0xff]
    %v731 = vld [vmem:[#allocation7 + $0x30] sm:$0xff]
    %v732 = vld [vmem:[#allocation7 + $0x38] sm:$0xff]
    %v733 = vld [vmem:[#allocation7 + $0x40] sm:$0xff]
    %v734 = vld [vmem:[#allocation7 + $0x48] sm:$0xff]
    %v735 = vld [vmem:[#allocation7 + $0x50] sm:$0xff]
    %v736 = vld [vmem:[#allocation7 + $0x58] sm:$0xff]
    %v737 = vld [vmem:[#allocation7 + $0x60] sm:$0xff]
    %v738 = vld [vmem:[#allocation7 + $0x68] sm:$0xff]
    %v739 = vld [vmem:[#allocation7 + $0x70] sm:$0xff]
    %v740 = vld [vmem:[#allocation7 + $0x78] sm:$0xff]
    %v741 = vld [vmem:[#allocation7 + $0x80] sm:$0xff]
    %v742 = vld [vmem:[#allocation7 + $0x88] sm:$0xff]
    %v743 = vld [vmem:[#allocation7 + $0x90] sm:$0xff]
    %v744 = vld [vmem:[#allocation7 + $0x98] sm:$0xff]
    %v745 = vld [vmem:[#allocation7 + $0xa0] sm:$0xff]
    %v746 = vld [vmem:[#allocation7 + $0xa8] sm:$0xff]
    %v747 = vld [vmem:[#allocation7 + $0xb0] sm:$0xff]
    %v748 = vld [vmem:[#allocation7 + $0xb8] sm:$0xff]
    %v749 = vld [vmem:[#allocation7 + $0xc0] sm:$0xff]
    %v750 = vld [vmem:[#allocation7 + $0xc8] sm:$0xff]
    %v751 = vld [vmem:[#allocation7 + $0xd0] sm:$0xff]
    %v752 = vld [vmem:[#allocation7 + $0xd8] sm:$0xff]
    %v753 = vld [vmem:[#allocation7 + $0xe0] sm:$0xff]
    %v754 = vld [vmem:[#allocation7 + $0xe8] sm:$0xff]
    %v755 = vld [vmem:[#allocation7 + $0xf0] sm:$0xff]
    %v756 = vld [vmem:[#allocation7 + $0xf8] sm:$0xff]
    %v757 = vld [vmem:[#allocation7 + $0x100] sm:$0xff]
    %v758 = vld [vmem:[#allocation7 + $0x108] sm:$0xff]
    %v759 = vld [vmem:[#allocation7 + $0x110] sm:$0xff]
    %v760 = vld [vmem:[#allocation7 + $0x118] sm:$0xff]
    %v761 = vld [vmem:[#allocation7 + $0x120] sm:$0xff]
    %v762 = vld [vmem:[#allocation7 + $0x128] sm:$0xff]
    %v763 = vld [vmem:[#allocation7 + $0x130] sm:$0xff]
    %v764 = vld [vmem:[#allocation7 + $0x138] sm:$0xff]
    %v765 = vld [vmem:[#allocation7 + $0x140] sm:$0xff]
    %v766 = vld [vmem:[#allocation7 + $0x148] sm:$0xff]
    %v767 = vld [vmem:[#allocation7 + $0x150] sm:$0xff]
    %v768 = vld [vmem:[#allocation7 + $0x158] sm:$0xff]
    %v769 = vld [vmem:[#allocation7 + $0x160] sm:$0xff]
    %v770 = vld [vmem:[#allocation7 + $0x168] sm:$0xff]
    %v771 = vld [vmem:[#allocation7 + $0x170] sm:$0xff]
    %v772 = vld [vmem:[#allocation7 + $0x178] sm:$0xff]
    %v773 = vld [vmem:[#allocation7 + $0x180] sm:$0xff]
    %v774 = vld [vmem:[#allocation7 + $0x188] sm:$0xff]
    %v775 = vld [vmem:[#allocation7 + $0x190] sm:$0xff]
    %v776 = vld [vmem:[#allocation7 + $0x198] sm:$0xff]
    %v777 = vld [vmem:[#allocation7 + $0x1a0] sm:$0xff]
    %v778 = vld [vmem:[#allocation7 + $0x1a8] sm:$0xff]
    %v779 = vld [vmem:[#allocation7 + $0x1b0] sm:$0xff]
    %v780 = vld [vmem:[#allocation7 + $0x1b8] sm:$0xff]
    %v781 = vld [vmem:[#allocation7 + $0x1c0] sm:$0xff]
    %v782 = vld [vmem:[#allocation7 + $0x1c8] sm:$0xff]
    %v783 = vld [vmem:[#allocation7 + $0x1d0] sm:$0xff]
    %v784 = vld [vmem:[#allocation7 + $0x1d8] sm:$0xff]
    %v785 = vld [vmem:[#allocation7 + $0x1e0] sm:$0xff]
    %v786 = vld [vmem:[#allocation7 + $0x1e8] sm:$0xff]
    %v787 = vld [vmem:[#allocation7 + $0x1f0] sm:$0xff]
    %v788 = vld [vmem:[#allocation7 + $0x1f8] sm:$0xff]
    %v789 = vld [vmem:[#allocation7 + $0x200] sm:$0xff]
    %v790 = vld [vmem:[#allocation7 + $0x208] sm:$0xff]
    %v791 = vld [vmem:[#allocation7 + $0x210] sm:$0xff]
    %v792 = vld [vmem:[#allocation7 + $0x218] sm:$0xff]
    %v793 = vld [vmem:[#allocation7 + $0x220] sm:$0xff]
    %v794 = vld [vmem:[#allocation7 + $0x228] sm:$0xff]
    %v795 = vld [vmem:[#allocation7 + $0x230] sm:$0xff]
    %v796 = vld [vmem:[#allocation7 + $0x238] sm:$0xff]
    %v797 = vld [vmem:[#allocation7 + $0x240] sm:$0xff]
    %v798 = vld [vmem:[#allocation7 + $0x248] sm:$0xff]
    %v799 = vld [vmem:[#allocation7 + $0x250] sm:$0xff]
    %v800 = vld [vmem:[#allocation7 + $0x258] sm:$0xff]
    %v801 = vld [vmem:[#allocation7 + $0x260] sm:$0xff]
    %v802 = vld [vmem:[#allocation7 + $0x268] sm:$0xff]
    %v803 = vld [vmem:[#allocation7 + $0x270] sm:$0xff]
    %v804 = vld [vmem:[#allocation7 + $0x278] sm:$0xff]
    %v805 = vld [vmem:[#allocation7 + $0x280] sm:$0xff]
    %v806 = vld [vmem:[#allocation7 + $0x288] sm:$0xff]
    %v807 = vld [vmem:[#allocation7 + $0x290] sm:$0xff]
    %v808 = vld [vmem:[#allocation7 + $0x298] sm:$0xff]
    %v809 = vld [vmem:[#allocation7 + $0x2a0] sm:$0xff]
    %v810 = vld [vmem:[#allocation7 + $0x2a8] sm:$0xff]
    %v811 = vld [vmem:[#allocation7 + $0x2b0] sm:$0xff]
    %v812 = vld [vmem:[#allocation7 + $0x2b8] sm:$0xff]
    %v813 = vld [vmem:[#allocation7 + $0x2c0] sm:$0xff]
    %v814 = vld [vmem:[#allocation7 + $0x2c8] sm:$0xff]
    %v815 = vld [vmem:[#allocation7 + $0x2d0] sm:$0xff]
    %v816 = vld [vmem:[#allocation7 + $0x2d8] sm:$0xff]
    %v817 = vld [vmem:[#allocation7 + $0x2e0] sm:$0xff]
    %v818 = vld [vmem:[#allocation7 + $0x2e8] sm:$0xff]
    %v819 = vld [vmem:[#allocation7 + $0x2f0] sm:$0xff]
    %v820 = vld [vmem:[#allocation7 + $0x2f8] sm:$0xff]
    %v821 = vld [vmem:[%s5] sm:$0x3]
    %v823 = vlaneseq
    %v824 = vshrl.u32 %v823, 7
    %v825 = vsub.s32 0, %v824
    %v826 = vrot.slane %v821, %v825
    %v827 = vlaneseq
    %v828 = vshrl.u32 %v827, 7
    %v829 = vsub.s32 1, %v828
    %v830 = vrot.slane %v821, %v829
    %v929 = vunpack.c.l.b16 %v725
    %v930 = vunpack.c.h.b16 %v725
    %v931 = vunpack.c.l.b16 %v726
    %v932 = vunpack.c.h.b16 %v726
    %v933 = vunpack.c.l.b16 %v727
    %v934 = vunpack.c.h.b16 %v727
    %v935 = vunpack.c.l.b16 %v728
    %v936 = vunpack.c.h.b16 %v728
    %v937 = vunpack.c.l.b16 %v729
    %v938 = vunpack.c.h.b16 %v729
    %v939 = vunpack.c.l.b16 %v730
    %v940 = vunpack.c.h.b16 %v730
    %v941 = vunpack.c.l.b16 %v731
    %v942 = vunpack.c.h.b16 %v731
    %v943 = vunpack.c.l.b16 %v732
    %v944 = vunpack.c.h.b16 %v732
    %v945 = vunpack.c.l.b16 %v733
    %v946 = vunpack.c.h.b16 %v733
    %v947 = vunpack.c.l.b16 %v734
    %v948 = vunpack.c.h.b16 %v734
    %v949 = vunpack.c.l.b16 %v735
    %v950 = vunpack.c.h.b16 %v735
    %v951 = vunpack.c.l.b16 %v736
    %v952 = vunpack.c.h.b16 %v736
    %v953 = vunpack.c.l.b16 %v737
    %v954 = vunpack.c.h.b16 %v737
    %v955 = vunpack.c.l.b16 %v738
    %v956 = vunpack.c.h.b16 %v738
    %v957 = vunpack.c.l.b16 %v739
    %v958 = vunpack.c.h.b16 %v739
    %v959 = vunpack.c.l.b16 %v740
    %v960 = vunpack.c.h.b16 %v740
    %v961 = vunpack.c.l.b16 %v741
    %v962 = vunpack.c.h.b16 %v741
    %v963 = vunpack.c.l.b16 %v742
    %v964 = vunpack.c.h.b16 %v742
    %v965 = vunpack.c.l.b16 %v743
    %v966 = vunpack.c.h.b16 %v743
    %v967 = vunpack.c.l.b16 %v744
    %v968 = vunpack.c.h.b16 %v744
    %v969 = vunpack.c.l.b16 %v745
    %v970 = vunpack.c.h.b16 %v745
    %v971 = vunpack.c.l.b16 %v746
    %v972 = vunpack.c.h.b16 %v746
    %v973 = vunpack.c.l.b16 %v747
    %v974 = vunpack.c.h.b16 %v747
    %v975 = vunpack.c.l.b16 %v748
    %v976 = vunpack.c.h.b16 %v748
    %v977 = vunpack.c.l.b16 %v749
    %v978 = vunpack.c.h.b16 %v749
    %v979 = vunpack.c.l.b16 %v750
    %v980 = vunpack.c.h.b16 %v750
    %v981 = vunpack.c.l.b16 %v751
    %v982 = vunpack.c.h.b16 %v751
    %v983 = vunpack.c.l.b16 %v752
    %v984 = vunpack.c.h.b16 %v752
    %v985 = vunpack.c.l.b16 %v753
    %v986 = vunpack.c.h.b16 %v753
    %v987 = vunpack.c.l.b16 %v754
    %v988 = vunpack.c.h.b16 %v754
    %v989 = vunpack.c.l.b16 %v755
    %v990 = vunpack.c.h.b16 %v755
    %v991 = vunpack.c.l.b16 %v756
    %v992 = vunpack.c.h.b16 %v756
    %v993 = vunpack.c.l.b16 %v757
    %v994 = vunpack.c.h.b16 %v757
    %v995 = vunpack.c.l.b16 %v758
    %v996 = vunpack.c.h.b16 %v758
    %v997 = vunpack.c.l.b16 %v759
    %v998 = vunpack.c.h.b16 %v759
    %v999 = vunpack.c.l.b16 %v760
    %v1000 = vunpack.c.h.b16 %v760
    %v1001 = vunpack.c.l.b16 %v761
    %v1002 = vunpack.c.h.b16 %v761
    %v1003 = vunpack.c.l.b16 %v762
    %v1004 = vunpack.c.h.b16 %v762
    %v1005 = vunpack.c.l.b16 %v763
    %v1006 = vunpack.c.h.b16 %v763
    %v1007 = vunpack.c.l.b16 %v764
    %v1008 = vunpack.c.h.b16 %v764
    %v1009 = vunpack.c.l.b16 %v765
    %v1010 = vunpack.c.h.b16 %v765
    %v1011 = vunpack.c.l.b16 %v766
    %v1012 = vunpack.c.h.b16 %v766
    %v1013 = vunpack.c.l.b16 %v767
    %v1014 = vunpack.c.h.b16 %v767
    %v1015 = vunpack.c.l.b16 %v768
    %v1016 = vunpack.c.h.b16 %v768
    %v1017 = vunpack.c.l.b16 %v769
    %v1018 = vunpack.c.h.b16 %v769
    %v1019 = vunpack.c.l.b16 %v770
    %v1020 = vunpack.c.h.b16 %v770
    %v1021 = vunpack.c.l.b16 %v771
    %v1022 = vunpack.c.h.b16 %v771
    %v1023 = vunpack.c.l.b16 %v772
    %v1024 = vunpack.c.h.b16 %v772
    %v1025 = vunpack.c.l.b16 %v773
    %v1026 = vunpack.c.h.b16 %v773
    %v1027 = vunpack.c.l.b16 %v774
    %v1028 = vunpack.c.h.b16 %v774
    %v1029 = vunpack.c.l.b16 %v775
    %v1030 = vunpack.c.h.b16 %v775
    %v1031 = vunpack.c.l.b16 %v776
    %v1032 = vunpack.c.h.b16 %v776
    %v1033 = vunpack.c.l.b16 %v777
    %v1034 = vunpack.c.h.b16 %v777
    %v1035 = vunpack.c.l.b16 %v778
    %v1036 = vunpack.c.h.b16 %v778
    %v1037 = vunpack.c.l.b16 %v779
    %v1038 = vunpack.c.h.b16 %v779
    %v1039 = vunpack.c.l.b16 %v780
    %v1040 = vunpack.c.h.b16 %v780
    %v1041 = vunpack.c.l.b16 %v781
    %v1042 = vunpack.c.h.b16 %v781
    %v1043 = vunpack.c.l.b16 %v782
    %v1044 = vunpack.c.h.b16 %v782
    %v1045 = vunpack.c.l.b16 %v783
    %v1046 = vunpack.c.h.b16 %v783
    %v1047 = vunpack.c.l.b16 %v784
    %v1048 = vunpack.c.h.b16 %v784
    %v1049 = vunpack.c.l.b16 %v785
    %v1050 = vunpack.c.h.b16 %v785
    %v1051 = vunpack.c.l.b16 %v786
    %v1052 = vunpack.c.h.b16 %v786
    %v1053 = vunpack.c.l.b16 %v787
    %v1054 = vunpack.c.h.b16 %v787
    %v1055 = vunpack.c.l.b16 %v788
    %v1056 = vunpack.c.h.b16 %v788
    %v1057 = vunpack.c.l.b16 %v789
    %v1058 = vunpack.c.h.b16 %v789
    %v1059 = vunpack.c.l.b16 %v790
    %v1060 = vunpack.c.h.b16 %v790
    %v1061 = vunpack.c.l.b16 %v791
    %v1062 = vunpack.c.h.b16 %v791
    %v1063 = vunpack.c.l.b16 %v792
    %v1064 = vunpack.c.h.b16 %v792
    %v1065 = vunpack.c.l.b16 %v793
    %v1066 = vunpack.c.h.b16 %v793
    %v1067 = vunpack.c.l.b16 %v794
    %v1068 = vunpack.c.h.b16 %v794
    %v1069 = vunpack.c.l.b16 %v795
    %v1070 = vunpack.c.h.b16 %v795
    %v1071 = vunpack.c.l.b16 %v796
    %v1072 = vunpack.c.h.b16 %v796
    %v1073 = vunpack.c.l.b16 %v797
    %v1074 = vunpack.c.h.b16 %v797
    %v1075 = vunpack.c.l.b16 %v798
    %v1076 = vunpack.c.h.b16 %v798
    %v1077 = vunpack.c.l.b16 %v799
    %v1078 = vunpack.c.h.b16 %v799
    %v1079 = vunpack.c.l.b16 %v800
    %v1080 = vunpack.c.h.b16 %v800
    %v1081 = vunpack.c.l.b16 %v801
    %v1082 = vunpack.c.h.b16 %v801
    %v1083 = vunpack.c.l.b16 %v802
    %v1084 = vunpack.c.h.b16 %v802
    %v1085 = vunpack.c.l.b16 %v803
    %v1086 = vunpack.c.h.b16 %v803
    %v1087 = vunpack.c.l.b16 %v804
    %v1088 = vunpack.c.h.b16 %v804
    %v1089 = vunpack.c.l.b16 %v805
    %v1090 = vunpack.c.h.b16 %v805
    %v1091 = vunpack.c.l.b16 %v806
    %v1092 = vunpack.c.h.b16 %v806
    %v1093 = vunpack.c.l.b16 %v807
    %v1094 = vunpack.c.h.b16 %v807
    %v1095 = vunpack.c.l.b16 %v808
    %v1096 = vunpack.c.h.b16 %v808
    %v1097 = vunpack.c.l.b16 %v809
    %v1098 = vunpack.c.h.b16 %v809
    %v1099 = vunpack.c.l.b16 %v810
    %v1100 = vunpack.c.h.b16 %v810
    %v1101 = vunpack.c.l.b16 %v811
    %v1102 = vunpack.c.h.b16 %v811
    %v1103 = vunpack.c.l.b16 %v812
    %v1104 = vunpack.c.h.b16 %v812
    %v1105 = vunpack.c.l.b16 %v813
    %v1106 = vunpack.c.h.b16 %v813
    %v1107 = vunpack.c.l.b16 %v814
    %v1108 = vunpack.c.h.b16 %v814
    %v1109 = vunpack.c.l.b16 %v815
    %v1110 = vunpack.c.h.b16 %v815
    %v1111 = vunpack.c.l.b16 %v816
    %v1112 = vunpack.c.h.b16 %v816
    %v1113 = vunpack.c.l.b16 %v817
    %v1114 = vunpack.c.h.b16 %v817
    %v1115 = vunpack.c.l.b16 %v818
    %v1116 = vunpack.c.h.b16 %v818
    %v1117 = vunpack.c.l.b16 %v819
    %v1118 = vunpack.c.h.b16 %v819
    %v1119 = vunpack.c.l.b16 %v820
    %v1120 = vunpack.c.h.b16 %v820
    %v1121 = vpack.c.b16 %v931, %v929
    %v1122 = vpack.c.b16 %v932, %v930
    %v1123 = vpack.c.b16 %v935, %v933
    %v1124 = vpack.c.b16 %v936, %v934
    %v1125 = vpack.c.b16 %v939, %v937
    %v1126 = vpack.c.b16 %v940, %v938
    %v1127 = vpack.c.b16 %v943, %v941
    %v1128 = vpack.c.b16 %v944, %v942
    %v1129 = vpack.c.b16 %v947, %v945
    %v1130 = vpack.c.b16 %v948, %v946
    %v1131 = vpack.c.b16 %v951, %v949
    %v1132 = vpack.c.b16 %v952, %v950
    %v1133 = vpack.c.b16 %v955, %v953
    %v1134 = vpack.c.b16 %v956, %v954
    %v1135 = vpack.c.b16 %v959, %v957
    %v1136 = vpack.c.b16 %v960, %v958
    %v1137 = vpack.c.b16 %v963, %v961
    %v1138 = vpack.c.b16 %v964, %v962
    %v1139 = vpack.c.b16 %v967, %v965
    %v1140 = vpack.c.b16 %v968, %v966
    %v1141 = vpack.c.b16 %v971, %v969
    %v1142 = vpack.c.b16 %v972, %v970
    %v1143 = vpack.c.b16 %v975, %v973
    %v1144 = vpack.c.b16 %v976, %v974
    %v1145 = vpack.c.b16 %v979, %v977
    %v1146 = vpack.c.b16 %v980, %v978
    %v1147 = vpack.c.b16 %v983, %v981
    %v1148 = vpack.c.b16 %v984, %v982
    %v1149 = vpack.c.b16 %v987, %v985
    %v1150 = vpack.c.b16 %v988, %v986
    %v1151 = vpack.c.b16 %v991, %v989
    %v1152 = vpack.c.b16 %v992, %v990
    %v1153 = vpack.c.b16 %v995, %v993
    %v1154 = vpack.c.b16 %v996, %v994
    %v1155 = vpack.c.b16 %v999, %v997
    %v1156 = vpack.c.b16 %v1000, %v998
    %v1157 = vpack.c.b16 %v1003, %v1001
    %v1158 = vpack.c.b16 %v1004, %v1002
    %v1159 = vpack.c.b16 %v1007, %v1005
    %v1160 = vpack.c.b16 %v1008, %v1006
    %v1161 = vpack.c.b16 %v1011, %v1009
    %v1162 = vpack.c.b16 %v1012, %v1010
    %v1163 = vpack.c.b16 %v1015, %v1013
    %v1164 = vpack.c.b16 %v1016, %v1014
    %v1165 = vpack.c.b16 %v1019, %v1017
    %v1166 = vpack.c.b16 %v1020, %v1018
    %v1167 = vpack.c.b16 %v1023, %v1021
    %v1168 = vpack.c.b16 %v1024, %v1022
    %v1169 = vpack.c.b16 %v1027, %v1025
    %v1170 = vpack.c.b16 %v1028, %v1026
    %v1171 = vpack.c.b16 %v1031, %v1029
    %v1172 = vpack.c.b16 %v1032, %v1030
    %v1173 = vpack.c.b16 %v1035, %v1033
    %v1174 = vpack.c.b16 %v1036, %v1034
    %v1175 = vpack.c.b16 %v1039, %v1037
    %v1176 = vpack.c.b16 %v1040, %v1038
    %v1177 = vpack.c.b16 %v1043, %v1041
    %v1178 = vpack.c.b16 %v1044, %v1042
    %v1179 = vpack.c.b16 %v1047, %v1045
    %v1180 = vpack.c.b16 %v1048, %v1046
    %v1181 = vpack.c.b16 %v1051, %v1049
    %v1182 = vpack.c.b16 %v1052, %v1050
    %v1183 = vpack.c.b16 %v1055, %v1053
    %v1184 = vpack.c.b16 %v1056, %v1054
    %v1185 = vpack.c.b16 %v1059, %v1057
    %v1186 = vpack.c.b16 %v1060, %v1058
    %v1187 = vpack.c.b16 %v1063, %v1061
    %v1188 = vpack.c.b16 %v1064, %v1062
    %v1189 = vpack.c.b16 %v1067, %v1065
    %v1190 = vpack.c.b16 %v1068, %v1066
    %v1191 = vpack.c.b16 %v1071, %v1069
    %v1192 = vpack.c.b16 %v1072, %v1070
    %v1193 = vpack.c.b16 %v1075, %v1073
    %v1194 = vpack.c.b16 %v1076, %v1074
    %v1195 = vpack.c.b16 %v1079, %v1077
    %v1196 = vpack.c.b16 %v1080, %v1078
    %v1197 = vpack.c.b16 %v1083, %v1081
    %v1198 = vpack.c.b16 %v1084, %v1082
    %v1199 = vpack.c.b16 %v1087, %v1085
    %v1200 = vpack.c.b16 %v1088, %v1086
    %v1201 = vpack.c.b16 %v1091, %v1089
    %v1202 = vpack.c.b16 %v1092, %v1090
    %v1203 = vpack.c.b16 %v1095, %v1093
    %v1204 = vpack.c.b16 %v1096, %v1094
    %v1205 = vpack.c.b16 %v1099, %v1097
    %v1206 = vpack.c.b16 %v1100, %v1098
    %v1207 = vpack.c.b16 %v1103, %v1101
    %v1208 = vpack.c.b16 %v1104, %v1102
    %v1209 = vpack.c.b16 %v1107, %v1105
    %v1210 = vpack.c.b16 %v1108, %v1106
    %v1211 = vpack.c.b16 %v1111, %v1109
    %v1212 = vpack.c.b16 %v1112, %v1110
    %v1213 = vpack.c.b16 %v1115, %v1113
    %v1214 = vpack.c.b16 %v1116, %v1114
    %v1215 = vpack.c.b16 %v1119, %v1117
    %v1216 = vpack.c.b16 %v1120, %v1118
    %1313 = vmatprep.subr.bf16.mxu0 %v1136
    %1314 = vmatpush1.bf16.msra.mxu0 %v1135
    %1315 = vmatprep.subr.bf16.mxu0 %v1134
    %1316 = vmatpush1.bf16.msra.mxu0 %v1133
    %1317 = vmatprep.subr.bf16.mxu0 %v1132
    %1318 = vmatpush1.bf16.msra.mxu0 %v1131
    %1319 = vmatprep.subr.bf16.mxu0 %v1130
    %1320 = vmatpush1.bf16.msra.mxu0 %v1129
    %1321 = vmatprep.subr.bf16.mxu0 %v1128
    %1322 = vmatpush1.bf16.msra.mxu0 %v1127
    %1323 = vmatprep.subr.bf16.mxu0 %v1126
    %1324 = vmatpush1.bf16.msra.mxu0 %v1125
    %1325 = vmatprep.subr.bf16.mxu0 %v1124
    %1326 = vmatpush1.bf16.msra.mxu0 %v1123
    %1327 = vmatprep.subr.bf16.mxu0 %v1122
    %1328 = vmatpush1.bf16.msra.mxu0 %v1121
    %1329 = vmatprep.subr.bf16.mxu0 %v1152
    %1330 = vmatpush2.bf16.msra.mxu0 %v1151
    %1331 = vmatprep.subr.bf16.mxu0 %v1150
    %1332 = vmatpush2.bf16.msra.mxu0 %v1149
    %1333 = vmatprep.subr.bf16.mxu0 %v1148
    %1334 = vmatpush2.bf16.msra.mxu0 %v1147
    %1335 = vmatprep.subr.bf16.mxu0 %v1146
    %1336 = vmatpush2.bf16.msra.mxu0 %v1145
    %1337 = vmatprep.subr.bf16.mxu0 %v1144
    %1338 = vmatpush2.bf16.msra.mxu0 %v1143
    %1339 = vmatprep.subr.bf16.mxu0 %v1142
    %1340 = vmatpush2.bf16.msra.mxu0 %v1141
    %1341 = vmatprep.subr.bf16.mxu0 %v1140
    %1342 = vmatpush2.bf16.msra.mxu0 %v1139
    %1343 = vmatprep.subr.bf16.mxu0 %v1138
    %1344 = vmatpush2.bf16.msra.mxu0 %v1137
    %1345 = vmatprep.mubr.bf16.mxu0 %v720
    %1346 = vmatmul.mubr.bf16.gmra.mxu0 %v719
    %v1347 = vpop.f32.mrf.mxu0
    %v1348 = vadd.f32 %v826, %v1347
    %v1349 = vpop.f32.mrf.mxu0
    %v1350 = vadd.f32 %v830, %v1349
    %v1351 = vpop.f32.mrf.mxu0
    %v1352 = vadd.f32 %v826, %v1351
    %v1353 = vpop.f32.mrf.mxu0
    %v1354 = vadd.f32 %v830, %v1353
    %1355 = vdwg.mxu0
    %1356 = vmatprep.subr.bf16.mxu0 %v1168
    %1357 = vmatpush1.bf16.msra.mxu0 %v1167
    %1358 = vmatprep.subr.bf16.mxu0 %v1166
    %1359 = vmatpush1.bf16.msra.mxu0 %v1165
    %1360 = vmatprep.subr.bf16.mxu0 %v1164
    %1361 = vmatpush1.bf16.msra.mxu0 %v1163
    %1362 = vmatprep.subr.bf16.mxu0 %v1162
    %1363 = vmatpush1.bf16.msra.mxu0 %v1161
    %1364 = vmatprep.subr.bf16.mxu0 %v1160
    %1365 = vmatpush1.bf16.msra.mxu0 %v1159
    %1366 = vmatprep.subr.bf16.mxu0 %v1158
    %1367 = vmatpush1.bf16.msra.mxu0 %v1157
    %1368 = vmatprep.subr.bf16.mxu0 %v1156
    %1369 = vmatpush1.bf16.msra.mxu0 %v1155
    %1370 = vmatprep.subr.bf16.mxu0 %v1154
    %1371 = vmatpush1.bf16.msra.mxu0 %v1153
    %1372 = vmatprep.subr.bf16.mxu0 %v1184
    %1373 = vmatpush2.bf16.msra.mxu0 %v1183
    %1374 = vmatprep.subr.bf16.mxu0 %v1182
    %1375 = vmatpush2.bf16.msra.mxu0 %v1181
    %1376 = vmatprep.subr.bf16.mxu0 %v1180
    %1377 = vmatpush2.bf16.msra.mxu0 %v1179
    %1378 = vmatprep.subr.bf16.mxu0 %v1178
    %1379 = vmatpush2.bf16.msra.mxu0 %v1177
    %1380 = vmatprep.subr.bf16.mxu0 %v1176
    %1381 = vmatpush2.bf16.msra.mxu0 %v1175
    %1382 = vmatprep.subr.bf16.mxu0 %v1174
    %1383 = vmatpush2.bf16.msra.mxu0 %v1173
    %1384 = vmatprep.subr.bf16.mxu0 %v1172
    %1385 = vmatpush2.bf16.msra.mxu0 %v1171
    %1386 = vmatprep.subr.bf16.mxu0 %v1170
    %1387 = vmatpush2.bf16.msra.mxu0 %v1169
    %1388 = vmatprep.mubr.bf16.mxu0 %v722
    %1389 = vmatmul.mubr.bf16.gmra.mxu0 %v721
    %v1390 = vpop.f32.mrf.mxu0
    %v1391 = vadd.f32 %v1348, %v1390
    %v1392 = vpop.f32.mrf.mxu0
    %v1393 = vadd.f32 %v1350, %v1392
    %v1394 = vpop.f32.mrf.mxu0
    %v1395 = vadd.f32 %v1352, %v1394
    %v1396 = vpop.f32.mrf.mxu0
    %v1397 = vadd.f32 %v1354, %v1396
    %1398 = vdwg.mxu0
    %1399 = vmatprep.subr.bf16.mxu0 %v1200
    %1400 = vmatpush1.bf16.msra.mxu0 %v1199
    %1401 = vmatprep.subr.bf16.mxu0 %v1198
    %1402 = vmatpush1.bf16.msra.mxu0 %v1197
    %1403 = vmatprep.subr.bf16.mxu0 %v1196
    %1404 = vmatpush1.bf16.msra.mxu0 %v1195
    %1405 = vmatprep.subr.bf16.mxu0 %v1194
    %1406 = vmatpush1.bf16.msra.mxu0 %v1193
    %1407 = vmatprep.subr.bf16.mxu0 %v1192
    %1408 = vmatpush1.bf16.msra.mxu0 %v1191
    %1409 = vmatprep.subr.bf16.mxu0 %v1190
    %1410 = vmatpush1.bf16.msra.mxu0 %v1189
    %1411 = vmatprep.subr.bf16.mxu0 %v1188
    %1412 = vmatpush1.bf16.msra.mxu0 %v1187
    %1413 = vmatprep.subr.bf16.mxu0 %v1186
    %1414 = vmatpush1.bf16.msra.mxu0 %v1185
    %1415 = vmatprep.subr.bf16.mxu0 %v1216
    %1416 = vmatpush2.bf16.msra.mxu0 %v1215
    %1417 = vmatprep.subr.bf16.mxu0 %v1214
    %1418 = vmatpush2.bf16.msra.mxu0 %v1213
    %1419 = vmatprep.subr.bf16.mxu0 %v1212
    %1420 = vmatpush2.bf16.msra.mxu0 %v1211
    %1421 = vmatprep.subr.bf16.mxu0 %v1210
    %1422 = vmatpush2.bf16.msra.mxu0 %v1209
    %1423 = vmatprep.subr.bf16.mxu0 %v1208
    %1424 = vmatpush2.bf16.msra.mxu0 %v1207
    %1425 = vmatprep.subr.bf16.mxu0 %v1206
    %1426 = vmatpush2.bf16.msra.mxu0 %v1205
    %1427 = vmatprep.subr.bf16.mxu0 %v1204
    %1428 = vmatpush2.bf16.msra.mxu0 %v1203
    %1429 = vmatprep.subr.bf16.mxu0 %v1202
    %1430 = vmatpush2.bf16.msra.mxu0 %v1201
    %1431 = vmatprep.mubr.bf16.mxu0 %v724
    %1432 = vmatmul.mubr.bf16.gmra.mxu0 %v723
    %v1433 = vpop.f32.mrf.mxu0
    %v1434 = vadd.f32 %v1391, %v1433
    %v1435 = vpop.f32.mrf.mxu0
    %v1436 = vadd.f32 %v1393, %v1435
    %v1437 = vpop.f32.mrf.mxu0
    %v1438 = vadd.f32 %v1395, %v1437
    %v1439 = vpop.f32.mrf.mxu0
    %v1440 = vadd.f32 %v1397, %v1439
    %1441 = vdwg.mxu0
    %v1442 = vmax.f32 %v1434, %v1436
    %1443 = vmax.xlane.f32.xlu0 %v1442
    %v1444 = vpop.xlane.xlu0 %1443
    %v1445 = vmax.f32 %v1438, %v1440
    %1446 = vmax.xlane.f32.xlu0 %v1445
    %v1447 = vpop.xlane.xlu0 %1446
    %vm1448 = vcmp.eq.f32.partialorder %v1434, %v1444
    %vm1449 = vcmp.eq.f32.partialorder %v1436, %v1444
    %vm1450 = vcmp.eq.f32.partialorder %v1438, %v1447
    %vm1451 = vcmp.eq.f32.partialorder %v1440, %v1447
    %v1452 = vsel %vm1448, %v78, 256
    %v1453 = vsel %vm1449, %v79, 256
    %v1454 = vsel %vm1450, %v78, 256
    %v1455 = vsel %vm1451, %v79, 256
    %vm1456 = vcmp.lt.s32.totalorder %v1452, %v1453
    %v1457 = vsel %vm1456, %v1452, %v1453
    %v1458 = vand.u32 %v1457, 65535
    %v1459 = vshra.s32 %v1457, 16
    %v1460 = vcvt.s32.f32 %v1458
    %v1461 = vcvt.s32.f32 %v1459
    %1462 = vmin.xlane.f32.xlu0 %v1461
    %v1463 = vpop.xlane.xlu0 %1462
    %vm1464 = vcmp.eq.f32.partialorder %v1461, %v1463
    %v1465 = vsel %vm1464, %v1460, inf
    %1466 = vmin.xlane.f32.xlu0 %v1465
    %v1467 = vpop.xlane.xlu0 %1466
    %v1468 = vcvt.f32.s32 %v1467
    %v1469 = vcvt.f32.s32 %v1463
    %v1470 = vshll.u32 %v1469, 16
    %v1471 = vadd.s32 %v1470, %v1468
    %vm1472 = vcmp.lt.s32.totalorder %v1454, %v1455
    %v1473 = vsel %vm1472, %v1454, %v1455
    %v1474 = vand.u32 %v1473, 65535
    %v1475 = vshra.s32 %v1473, 16
    %v1476 = vcvt.s32.f32 %v1474
    %v1477 = vcvt.s32.f32 %v1475
    %1478 = vmin.xlane.f32.xlu0 %v1477
    %v1479 = vpop.xlane.xlu0 %1478
    %vm1480 = vcmp.eq.f32.partialorder %v1477, %v1479
    %v1481 = vsel %vm1480, %v1476, inf
    %1482 = vmin.xlane.f32.xlu0 %v1481
    %v1483 = vpop.xlane.xlu0 %1482
    %v1484 = vcvt.f32.s32 %v1483
    %v1485 = vcvt.f32.s32 %v1479
    %v1486 = vshll.u32 %v1485, 16
    %v1487 = vadd.s32 %v1486, %v1484
    %vm1488 = vcmask 7168
    %1489 = vst.msk [vmem:[%s8] sm:$0xff] %vm1488, %v1471
    %1490 = vst.msk [vmem:[%s8 + $0x8] sm:$0xff] %vm1488, %v1487
    %v1491 = vrot.slane %v625, 4
    %v1492 = vadd.f32 %v625, %v1491
    %v1493 = vrot.slane %v1492, 2
    %v1494 = vadd.f32 %v1492, %v1493
    %v1495 = vrot.slane %v1494, 1
    %v1496 = vadd.f32 %v1494, %v1495
    %v1497 = vrot.slane %v627, 4
    %v1498 = vadd.f32 %v627, %v1497
    %v1499 = vrot.slane %v1498, 2
    %v1500 = vadd.f32 %v1498, %v1499
    %v1501 = vrot.slane %v1500, 1
    %v1502 = vadd.f32 %v1500, %v1501
    %v1503 = vrot.slane %v668, 4
    %v1504 = vadd.f32 %v668, %v1503
    %v1505 = vrot.slane %v1504, 2
    %v1506 = vadd.f32 %v1504, %v1505
    %v1507 = vrot.slane %v1506, 1
    %v1508 = vadd.f32 %v1506, %v1507
    %v1509 = vrot.slane %v670, 4
    %v1510 = vadd.f32 %v670, %v1509
    %v1511 = vrot.slane %v1510, 2
    %v1512 = vadd.f32 %v1510, %v1511
    %v1513 = vrot.slane %v1512, 1
    %v1514 = vadd.f32 %v1512, %v1513
    %v1515 = vrot.slane %v711, 4
    %v1516 = vadd.f32 %v711, %v1515
    %v1517 = vrot.slane %v1516, 2
    %v1518 = vadd.f32 %v1516, %v1517
    %v1519 = vrot.slane %v1518, 1
    %v1520 = vadd.f32 %v1518, %v1519
    %v1521 = vrot.slane %v713, 4
    %v1522 = vadd.f32 %v713, %v1521
    %v1523 = vrot.slane %v1522, 2
    %v1524 = vadd.f32 %v1522, %v1523
    %v1525 = vrot.slane %v1524, 1
    %v1526 = vadd.f32 %v1524, %v1525
    %v1527 = vrcp.pop 8.0
    %v1528 = vmul.f32 %v1496, %v1527
    %v1529 = vmul.f32 %v1502, %v1527
    %v1530 = vmul.f32 %v1508, %v1527
    %v1531 = vmul.f32 %v1514, %v1527
    %v1532 = vmul.f32 %v1520, %v1527
    %v1533 = vmul.f32 %v1526, %v1527
    %v1534 = vrot.slane %v629, 4
    %v1535 = vadd.f32 %v629, %v1534
    %v1536 = vrot.slane %v1535, 2
    %v1537 = vadd.f32 %v1535, %v1536
    %v1538 = vrot.slane %v1537, 1
    %v1539 = vadd.f32 %v1537, %v1538
    %v1540 = vrot.slane %v631, 4
    %v1541 = vadd.f32 %v631, %v1540
    %v1542 = vrot.slane %v1541, 2
    %v1543 = vadd.f32 %v1541, %v1542
    %v1544 = vrot.slane %v1543, 1
    %v1545 = vadd.f32 %v1543, %v1544
    %v1546 = vrot.slane %v672, 4
    %v1547 = vadd.f32 %v672, %v1546
    %v1548 = vrot.slane %v1547, 2
    %v1549 = vadd.f32 %v1547, %v1548
    %v1550 = vrot.slane %v1549, 1
    %v1551 = vadd.f32 %v1549, %v1550
    %v1552 = vrot.slane %v674, 4
    %v1553 = vadd.f32 %v674, %v1552
    %v1554 = vrot.slane %v1553, 2
    %v1555 = vadd.f32 %v1553, %v1554
    %v1556 = vrot.slane %v1555, 1
    %v1557 = vadd.f32 %v1555, %v1556
    %v1558 = vrot.slane %v715, 4
    %v1559 = vadd.f32 %v715, %v1558
    %v1560 = vrot.slane %v1559, 2
    %v1561 = vadd.f32 %v1559, %v1560
    %v1562 = vrot.slane %v1561, 1
    %v1563 = vadd.f32 %v1561, %v1562
    %v1564 = vrot.slane %v717, 4
    %v1565 = vadd.f32 %v717, %v1564
    %v1566 = vrot.slane %v1565, 2
    %v1567 = vadd.f32 %v1565, %v1566
    %v1568 = vrot.slane %v1567, 1
    %v1569 = vadd.f32 %v1567, %v1568
    %v1570 = vmul.f32 %v1539, %v1527
    %v1571 = vmul.f32 %v1545, %v1527
    %v1572 = vmul.f32 %v1551, %v1527
    %v1573 = vmul.f32 %v1557, %v1527
    %v1574 = vmul.f32 %v1563, %v1527
    %v1575 = vmul.f32 %v1569, %v1527
    %vm1576 = vcmask 1040384
    %v1577 = vsel %vm1576, %v1528, %v1570
    %v1578 = vsel %vm1576, %v1529, %v1571
    %v1579 = vsel %vm1576, %v1530, %v1572
    %v1580 = vsel %vm1576, %v1531, %v1573
    %v1581 = vsel %vm1576, %v1532, %v1574
    %v1582 = vsel %vm1576, %v1533, %v1575
    %v1583 = vld [vmem:[%s6] sm:$0xff]
    %v1584 = vld [vmem:[%s6 + $0x8] sm:$0xf]
    %v1587 = vlaneseq
    %v1588 = vshrl.u32 %v1587, 7
    %v1589 = vsub.s32 0, %v1588
    %v1590 = vrot.slane %v1583, %v1589
    %v1591 = vlaneseq
    %v1592 = vshrl.u32 %v1591, 7
    %v1593 = vsub.s32 2, %v1592
    %v1594 = vrot.slane %v1583, %v1593
    %v1595 = vlaneseq
    %v1596 = vshrl.u32 %v1595, 7
    %v1597 = vsub.s32 4, %v1596
    %v1598 = vrot.slane %v1583, %v1597
    %v1599 = vlaneseq
    %v1600 = vshrl.u32 %v1599, 7
    %v1601 = vsub.s32 6, %v1600
    %v1602 = vrot.slane %v1583, %v1601
    %v1603 = vlaneseq
    %v1604 = vshrl.u32 %v1603, 7
    %v1605 = vsub.s32 0, %v1604
    %v1606 = vrot.slane %v1584, %v1605
    %v1607 = vlaneseq
    %v1608 = vshrl.u32 %v1607, 7
    %v1609 = vsub.s32 2, %v1608
    %v1610 = vrot.slane %v1584, %v1609
    %v1617 = vlaneseq
    %v1618 = vshrl.u32 %v1617, 7
    %v1619 = vsub.s32 0, %v1618
    %v1620 = vrot.slane %v1590, %v1619
    %v1621 = vlaneseq
    %v1622 = vshrl.u32 %v1621, 7
    %v1623 = vsub.s32 0, %v1622
    %v1624 = vrot.slane %v1594, %v1623
    %v1625 = vlaneseq
    %v1626 = vshrl.u32 %v1625, 7
    %v1627 = vsub.s32 0, %v1626
    %v1628 = vrot.slane %v1598, %v1627
    %v1629 = vlaneseq
    %v1630 = vshrl.u32 %v1629, 7
    %v1631 = vsub.s32 0, %v1630
    %v1632 = vrot.slane %v1602, %v1631
    %v1633 = vlaneseq
    %v1634 = vshrl.u32 %v1633, 7
    %v1635 = vsub.s32 0, %v1634
    %v1636 = vrot.slane %v1606, %v1635
    %v1637 = vlaneseq
    %v1638 = vshrl.u32 %v1637, 7
    %v1639 = vsub.s32 0, %v1638
    %v1640 = vrot.slane %v1610, %v1639
    %v1641 = vmul.f32 %v1577, %v1620
    %v1642 = vmul.f32 %v1578, %v1624
    %v1643 = vmul.f32 %v1579, %v1628
    %v1644 = vmul.f32 %v1580, %v1632
    %v1645 = vmul.f32 %v1581, %v1636
    %v1646 = vmul.f32 %v1582, %v1640
    %vm1647 = vcmask 1041408
    %v1648 = vsel %vm1647, %v1641, 0.0
    %v1649 = vsel %vm1647, %v1642, 0.0
    %v1650 = vadd.f32 %v1648, %v1649
    %v1651 = vsel %vm1647, %v1643, 0.0
    %v1652 = vadd.f32 %v1650, %v1651
    %v1653 = vsel %vm1647, %v1644, 0.0
    %v1654 = vadd.f32 %v1652, %v1653
    %v1655 = vsel %vm1647, %v1645, 0.0
    %v1656 = vadd.f32 %v1654, %v1655
    %v1657 = vsel %vm1647, %v1646, 0.0
    %v1658 = vadd.f32 %v1656, %v1657
    %1659 = vadd.xlane.f32.xlu0 %v1658
    %v1660 = vpop.xlane.xlu0 %1659
    %v1661 = vlaneseq
    %v1662 = vshrl.u32 %v1661, 7
    %v1663 = vsub.s32 1, %v1662
    %v1664 = vrot.slane %v1583, %v1663
    %v1665 = vlaneseq
    %v1666 = vshrl.u32 %v1665, 7
    %v1667 = vsub.s32 3, %v1666
    %v1668 = vrot.slane %v1583, %v1667
    %v1669 = vlaneseq
    %v1670 = vshrl.u32 %v1669, 7
    %v1671 = vsub.s32 5, %v1670
    %v1672 = vrot.slane %v1583, %v1671
    %v1673 = vlaneseq
    %v1674 = vshrl.u32 %v1673, 7
    %v1675 = vsub.s32 7, %v1674
    %v1676 = vrot.slane %v1583, %v1675
    %v1677 = vlaneseq
    %v1678 = vshrl.u32 %v1677, 7
    %v1679 = vsub.s32 1, %v1678
    %v1680 = vrot.slane %v1584, %v1679
    %v1681 = vlaneseq
    %v1682 = vshrl.u32 %v1681, 7
    %v1683 = vsub.s32 3, %v1682
    %v1684 = vrot.slane %v1584, %v1683
    %v1691 = vlaneseq
    %v1692 = vshrl.u32 %v1691, 7
    %v1693 = vsub.s32 1, %v1692
    %v1694 = vrot.slane %v1664, %v1693
    %v1695 = vlaneseq
    %v1696 = vshrl.u32 %v1695, 7
    %v1697 = vsub.s32 1, %v1696
    %v1698 = vrot.slane %v1668, %v1697
    %v1699 = vlaneseq
    %v1700 = vshrl.u32 %v1699, 7
    %v1701 = vsub.s32 1, %v1700
    %v1702 = vrot.slane %v1672, %v1701
    %v1703 = vlaneseq
    %v1704 = vshrl.u32 %v1703, 7
    %v1705 = vsub.s32 1, %v1704
    %v1706 = vrot.slane %v1676, %v1705
    %v1707 = vlaneseq
    %v1708 = vshrl.u32 %v1707, 7
    %v1709 = vsub.s32 1, %v1708
    %v1710 = vrot.slane %v1680, %v1709
    %v1711 = vlaneseq
    %v1712 = vshrl.u32 %v1711, 7
    %v1713 = vsub.s32 1, %v1712
    %v1714 = vrot.slane %v1684, %v1713
    %v1715 = vmul.f32 %v1577, %v1694
    %v1716 = vmul.f32 %v1578, %v1698
    %v1717 = vmul.f32 %v1579, %v1702
    %v1718 = vmul.f32 %v1580, %v1706
    %v1719 = vmul.f32 %v1581, %v1710
    %v1720 = vmul.f32 %v1582, %v1714
    %v1721 = vsel %vm1647, %v1715, 0.0
    %v1722 = vsel %vm1647, %v1716, 0.0
    %v1723 = vadd.f32 %v1721, %v1722
    %v1724 = vsel %vm1647, %v1717, 0.0
    %v1725 = vadd.f32 %v1723, %v1724
    %v1726 = vsel %vm1647, %v1718, 0.0
    %v1727 = vadd.f32 %v1725, %v1726
    %v1728 = vsel %vm1647, %v1719, 0.0
    %v1729 = vadd.f32 %v1727, %v1728
    %v1730 = vsel %vm1647, %v1720, 0.0
    %v1731 = vadd.f32 %v1729, %v1730
    %1732 = vadd.xlane.f32.xlu0 %v1731
    %v1733 = vpop.xlane.xlu0 %1732
    %v1734 = vsel %vm1488, %v1660, %v1733
    %v1735 = vld [vmem:[%s7] sm:$0x1]
    %v1737 = vlaneseq
    %v1738 = vshrl.u32 %v1737, 7
    %v1739 = vsub.s32 0, %v1738
    %v1740 = vrot.slane %v1735, %v1739
    %v1742 = vadd.f32 %v1734, %v1740
    %vm1743 = vcmask 9216
    %v1744 = vsel %vm1743, %v1742, -inf
    %1745 = vmax.xlane.f32.xlu0 %v1744
    %v1746 = vpop.xlane.xlu0 %1745
    %v1747 = vsub.f32 %v1742, %v1746
    %v1748 = vmul.f32 %v1747, 1.442695
    %v1749 = vpow.pop %v1748
    %v1750 = vsel %vm1743, %v1749, 0.0
    %1751 = vadd.xlane.f32.xlu0 %v1750
    %v1752 = vpop.xlane.xlu0 %1751
    %v1753 = vrcp.pop %v1752
    %v1754 = vmul.f32 %v1749, %v1753
    %1755 = vst.msk [vmem:[#allocation8] sm:$0x3] %vm1743, %v1754
    %vm1756 = vcmp.eq.f32.partialorder %v1742, %v1746
    %v1757 = vsel %vm1756, %v78, 2
    %v1758 = vsel %vm1743, %v1757, 2147483647
    %v1759 = vand.u32 %v1758, 65535
    %v1760 = vshra.s32 %v1758, 16
    %v1761 = vcvt.s32.f32 %v1759
    %v1762 = vcvt.s32.f32 %v1760
    %1763 = vmin.xlane.f32.xlu0 %v1762
    %v1764 = vpop.xlane.xlu0 %1763
    %vm1765 = vcmp.eq.f32.partialorder %v1762, %v1764
    %v1766 = vsel %vm1765, %v1761, inf
    %1767 = vmin.xlane.f32.xlu0 %v1766
    %v1768 = vpop.xlane.xlu0 %1767
    %v1769 = vcvt.f32.s32 %v1768
    %v1770 = vcvt.f32.s32 %v1764
    %v1771 = vshll.u32 %v1770, 16
    %v1772 = vadd.s32 %v1771, %v1769
    %vm1773 = vcmask 1024
    %1774 = vst.msk [vmem:[%s10] sm:$0x3] %vm1773, %v1772
    // Predicated region
    $region46: #{tpu_custom_call.1} parent=1 // pred_check
      _
    $region47: #{tpu_custom_call.1} parent=1 // pred_check_branch
      %1776 = sbr.rel (0) target = $region49
    $region48: #{tpu_custom_call.1} parent=1 // pred_region
      _
    $region49: #{tpu_custom_call.1} parent=1 // pred_fallthru
      _
    // Predicated region
    $region50: #{tpu_custom_call.1} parent=1 // pred_check
      _
    $region51: #{tpu_custom_call.1} parent=1 // pred_check_branch
      %1778 = sbr.rel (0) target = $region53
    $region52: #{tpu_custom_call.1} parent=1 // pred_region
      %s1780 = ssub.s32 32, 32
      %1781 = vsyncadd [#allocation4], %s1780
      %s1783 = sshll.u32 [#allocation8], 4
      %s1784 = int_to_ptr.vmem [resolvable:$true] %s1783
      %1786 = dma.vmem_to_hbm [thread:$0]  %s1784, 32, %s9, [#allocation4]
    $region53: #{tpu_custom_call.1} parent=1 // pred_fallthru
      _
    // Predicated region
    $region54: #{tpu_custom_call.1} parent=1 // pred_check
      _
    $region55: #{tpu_custom_call.1} parent=1 // pred_check_branch
      %1788 = sbr.rel (0) target = $region57
    $region56: #{tpu_custom_call.1} parent=1 // pred_region
      _
    $region57: #{tpu_custom_call.1} parent=1 // pred_fallthru
      _
    // Predicated region
    $region58: #{tpu_custom_call.1} parent=1 // pred_check
      _
    $region59: #{tpu_custom_call.1} parent=1 // pred_check_branch
      %1790 = sbr.rel (0) target = $region61
    $region60: #{tpu_custom_call.1} parent=1 // pred_region
      _
    $region61: #{tpu_custom_call.1} parent=1 // pred_fallthru
      _
    // Predicated region
    $region62: #{tpu_custom_call.1} parent=1 // pred_check
      _
    $region63: #{tpu_custom_call.1} parent=1 // pred_check_branch
      %1792 = sbr.rel (0) target = $region65
    $region64: #{tpu_custom_call.1} parent=1 // pred_region
      %1793 = dma.done [#allocation4], 32
    $region65: #{tpu_custom_call.1} parent=1 // pred_fallthru
      _
    // Predicated region
    $region66: #{tpu_custom_call.1} parent=1 // pred_check
      _
    $region67: #{tpu_custom_call.1} parent=1 // pred_check_branch
      %1795 = sbr.rel (0) target = $region69
    $region68: #{tpu_custom_call.1} parent=1 // pred_region
      _
    $region69: #{tpu_custom_call.1} parent=1 // pred_fallthru
      _
    %1796 = vsyncpa [#allocation3], 1
    %1797 = vsyncpa [#allocation6], 1
    %1798 = vsyncpa [#allocation4], 1

</llo_original>
